<compile_context>
chip_gen: v6e
topology: v6e:2x2x1
jax: 0.10.0
libtpu: 0.0.40
codegen_flags: <defaults>
</compile_context>

<pallas_src>
import jax
import jax.numpy as jnp
from jax.experimental import pallas as pl
from jax.experimental.pallas import tpu as pltpu

N_CHANS = 3
KH, KW = 3, 3
PAD_H, PAD_W = 1, 3


def _make_conv_relu_l1_kernel(c_in, c_out, h, w):
    """Builds a kernel closure over static shapes.

    Kernel args:
      x_ref    : VMEM ref, shape (c_in, h, w), f32  (raw, unpadded image)
      w_ref    : SMEM ref, shape (c_out*c_in*KH*KW,), f32 (flattened weights)
      out_ref  : VMEM ref, shape (1, 1), f32 (scalar result)
      xpad_ref : VMEM scratch, shape (c_in, h+2*PAD_H, w+2*PAD_W), f32
    """
    h_out = h + 2 * PAD_H - KH + 1   # = h
    w_out = w + 2 * PAD_W - KW + 1   # = w + 4

    def kernel(x_ref, w_ref, out_ref, xpad_ref):
        # ---- in-kernel zero padding (saves an HBM round trip) ----
        xpad_ref[...] = jnp.zeros_like(xpad_ref)
        for ci in range(c_in):
            xpad_ref[ci, PAD_H:PAD_H + h, PAD_W:PAD_W + w] = x_ref[ci]
        xp = xpad_ref[...]           # (c_in, Hp, Wp) -> vregs

        # ---- conv: build each shifted view exactly once, reuse for all c_out
        accs = [jnp.zeros((h_out, w_out), jnp.float32) for _ in range(c_out)]
        for ci in range(c_in):
            for kh in range(KH):
                for kw in range(KW):
                    view = xp[ci, kh:kh + h_out, kw:kw + w_out]   # 27 unique slices
                    for co in range(c_out):
                        wv = w_ref[((co * c_in + ci) * KH + kh) * KW + kw]
                        accs[co] = accs[co] + wv * view

        # ---- ReLU, then a single reduction; abs(relu(x)) == relu(x), so no abs.
        relu_sum = jnp.zeros((h_out, w_out), jnp.float32)
        for co in range(c_out):
            relu_sum = relu_sum + jnp.maximum(accs[co], 0.0)
        out_ref[...] = (0.1 * jnp.sum(relu_sum)).reshape(1, 1)

    return kernel


def conv_relu_l1(image, weight):
    """image: (C_in, H, W) f32; weight: (C_out, C_in, KH, KW) f32 -> scalar f32."""
    c_out, c_in, _, _ = weight.shape
    _, h, w = image.shape
    hp = h + 2 * PAD_H
    wp = w + 2 * PAD_W

    x = image.astype(jnp.float32)
    wflat = weight.astype(jnp.float32).reshape(-1)

    kernel = _make_conv_relu_l1_kernel(c_in, c_out, h, w)

    out = pl.pallas_call(
        kernel,
        out_shape=jax.ShapeDtypeStruct((1, 1), jnp.float32),
        in_specs=[
            pl.BlockSpec(memory_space=pltpu.MemorySpace.VMEM),   # raw image
            pl.BlockSpec(memory_space=pltpu.MemorySpace.SMEM),   # flat weights
        ],
        out_specs=pl.BlockSpec(memory_space=pltpu.MemorySpace.VMEM),
        scratch_shapes=[pltpu.VMEM((c_in, hp, wp), jnp.float32)],  # padded image
    )(x, wflat)
    return out[0, 0]


def module0_forward(inputs, weight):
    """Mirrors Module0.forward: uses inputs[0] as the image, returns a scalar."""
    # TODO(synk): if ever mapped over the whole batch, fold it into a grid=(N,)
    # pallas_call with a lane-dense per-image output vector.
    return conv_relu_l1(inputs[0], weight)


def _reference(inputs, weight):
    """Pure-JAX reference (lax conv) for a correctness check."""
    image = inputs[0].astype(jnp.float32)[None]  # (1, C, H, W)
    y = jax.lax.conv_general_dilated(
        image, weight.astype(jnp.float32),
        window_strides=(1, 1),
        padding=((PAD_H, PAD_H), (PAD_W, PAD_W)),
        dimension_numbers=("NCHW", "OIHW", "NCHW"),
    )
    y = jnp.maximum(y, 0.0)
    return jnp.sum(0.1 * jnp.abs(y))


if __name__ == "__main__":
    key = jax.random.PRNGKey(0)
    k_in, k_w = jax.random.split(key)

    # Small shapes consistent with the module: batch=2, C=3, 16x16 images.
    inputs = jax.random.normal(k_in, (2, N_CHANS, 16, 16), dtype=jnp.float32)

    # Deterministic weight init (uniform in +/- 1/sqrt(fan_in), Conv2d-style).
    fan_in = N_CHANS * KH * KW
    bound = 1.0 / jnp.sqrt(jnp.float32(fan_in))
    weight = jax.random.uniform(
        k_w, (N_CHANS, N_CHANS, KH, KW), dtype=jnp.float32,
        minval=-bound, maxval=bound)

    out = module0_forward(inputs, weight)
    out = jax.block_until_ready(out)

    ref = jax.block_until_ready(_reference(inputs, weight))
    assert jnp.allclose(out, ref, rtol=1e-4, atol=1e-4), (out, ref)

    print("KERNEL_OK")
</pallas_src>

<mosaic_0001>
module attributes {stable_mosaic.version = 11 : i64} {
  func.func @kernel(%arg0: memref<3x16x16xf32, #tpu.memory_space<vmem>>, %arg1: memref<81xf32, #tpu.memory_space<smem>>, %arg2: memref<1x1xf32, #tpu.memory_space<vmem>>, %arg3: memref<3x18x22xf32, #tpu.memory_space<vmem>>) attributes {dimension_semantics = [], scalar_prefetch = 0 : i64, scratch_operands = 1 : i64, tpu.core_type = #tpu.core_type<tc>} {
    %cst = arith.constant 0.000000e+00 : f32
    %0 = vector.broadcast %cst : f32 to vector<3x18x22xf32>
    %c0 = arith.constant 0 : index
    %c0_0 = arith.constant 0 : index
    %c0_1 = arith.constant 0 : index
    %1 = vector.load %arg3[%c0, %c0_0, %c0_1] : memref<3x18x22xf32, #tpu.memory_space<vmem>>, vector<3x18x22xf32>
    tpu.vector_store %arg3[%c0, %c0_0, %c0_1], %0 {strides = array<i32>} : memref<3x18x22xf32, #tpu.memory_space<vmem>>, vector<3x18x22xf32>,
    %c0_2 = arith.constant 0 : index
    %c0_3 = arith.constant 0 : index
    %c0_4 = arith.constant 0 : index
    %2 = vector.load %arg0[%c0_2, %c0_3, %c0_4] : memref<3x16x16xf32, #tpu.memory_space<vmem>>, vector<1x16x16xf32>
    %3 = vector.shape_cast %2 : vector<1x16x16xf32> to vector<16x16xf32>
    %c0_5 = arith.constant 0 : index
    %c1 = arith.constant 1 : index
    %c3 = arith.constant 3 : index
    %4 = vector.load %arg3[%c0_5, %c1, %c3] : memref<3x18x22xf32, #tpu.memory_space<vmem>>, vector<1x16x16xf32>
    %5 = vector.shape_cast %4 : vector<1x16x16xf32> to vector<16x16xf32>
    %6 = vector.shape_cast %3 : vector<16x16xf32> to vector<1x16x16xf32>
    tpu.vector_store %arg3[%c0_5, %c1, %c3], %6 {strides = array<i32>} : memref<3x18x22xf32, #tpu.memory_space<vmem>>, vector<1x16x16xf32>,
    %c1_6 = arith.constant 1 : index
    %c0_7 = arith.constant 0 : index
    %c0_8 = arith.constant 0 : index
    %7 = vector.load %arg0[%c1_6, %c0_7, %c0_8] : memref<3x16x16xf32, #tpu.memory_space<vmem>>, vector<1x16x16xf32>
    %8 = vector.shape_cast %7 : vector<1x16x16xf32> to vector<16x16xf32>
    %c1_9 = arith.constant 1 : index
    %c1_10 = arith.constant 1 : index
    %c3_11 = arith.constant 3 : index
    %9 = vector.load %arg3[%c1_9, %c1_10, %c3_11] : memref<3x18x22xf32, #tpu.memory_space<vmem>>, vector<1x16x16xf32>
    %10 = vector.shape_cast %9 : vector<1x16x16xf32> to vector<16x16xf32>
    %11 = vector.shape_cast %8 : vector<16x16xf32> to vector<1x16x16xf32>
    tpu.vector_store %arg3[%c1_9, %c1_10, %c3_11], %11 {strides = array<i32>} : memref<3x18x22xf32, #tpu.memory_space<vmem>>, vector<1x16x16xf32>,
    %c2 = arith.constant 2 : index
    %c0_12 = arith.constant 0 : index
    %c0_13 = arith.constant 0 : index
    %12 = vector.load %arg0[%c2, %c0_12, %c0_13] : memref<3x16x16xf32, #tpu.memory_space<vmem>>, vector<1x16x16xf32>
    %13 = vector.shape_cast %12 : vector<1x16x16xf32> to vector<16x16xf32>
    %c2_14 = arith.constant 2 : index
    %c1_15 = arith.constant 1 : index
    %c3_16 = arith.constant 3 : index
    %14 = vector.load %arg3[%c2_14, %c1_15, %c3_16] : memref<3x18x22xf32, #tpu.memory_space<vmem>>, vector<1x16x16xf32>
    %15 = vector.shape_cast %14 : vector<1x16x16xf32> to vector<16x16xf32>
    %16 = vector.shape_cast %13 : vector<16x16xf32> to vector<1x16x16xf32>
    tpu.vector_store %arg3[%c2_14, %c1_15, %c3_16], %16 {strides = array<i32>} : memref<3x18x22xf32, #tpu.memory_space<vmem>>, vector<1x16x16xf32>,
    %c0_17 = arith.constant 0 : index
    %c0_18 = arith.constant 0 : index
    %c0_19 = arith.constant 0 : index
    %17 = vector.load %arg3[%c0_17, %c0_18, %c0_19] : memref<3x18x22xf32, #tpu.memory_space<vmem>>, vector<3x18x22xf32>
    %cst_20 = arith.constant 0.000000e+00 : f32
    %18 = vector.broadcast %cst_20 : f32 to vector<16x20xf32>
    %cst_21 = arith.constant 0.000000e+00 : f32
    %19 = vector.broadcast %cst_21 : f32 to vector<16x20xf32>
    %cst_22 = arith.constant 0.000000e+00 : f32
    %20 = vector.broadcast %cst_22 : f32 to vector<16x20xf32>
    %21 = vector.extract_strided_slice %17 {offsets = [0, 0, 0], sizes = [1, 16, 20], strides = [1, 1, 1]} : vector<3x18x22xf32> to vector<1x16x20xf32>
    %22 = vector.shape_cast %21 : vector<1x16x20xf32> to vector<16x20xf32>
    %c0_23 = arith.constant 0 : index
    %23 = memref.load %arg1[%c0_23] : memref<81xf32, #tpu.memory_space<smem>>
    %24 = vector.broadcast %23 : f32 to vector<16x20xf32>
    %25 = arith.mulf %24, %22 : vector<16x20xf32>
    %26 = arith.addf %18, %25 : vector<16x20xf32>
    %c27 = arith.constant 27 : index
    %27 = memref.load %arg1[%c27] : memref<81xf32, #tpu.memory_space<smem>>
    %28 = vector.broadcast %27 : f32 to vector<16x20xf32>
    %29 = arith.mulf %28, %22 : vector<16x20xf32>
    %30 = arith.addf %19, %29 : vector<16x20xf32>
    %c54 = arith.constant 54 : index
    %31 = memref.load %arg1[%c54] : memref<81xf32, #tpu.memory_space<smem>>
    %32 = vector.broadcast %31 : f32 to vector<16x20xf32>
    %33 = arith.mulf %32, %22 : vector<16x20xf32>
    %34 = arith.addf %20, %33 : vector<16x20xf32>
    %35 = vector.extract_strided_slice %17 {offsets = [0, 0, 1], sizes = [1, 16, 20], strides = [1, 1, 1]} : vector<3x18x22xf32> to vector<1x16x20xf32>
    %36 = vector.shape_cast %35 : vector<1x16x20xf32> to vector<16x20xf32>
    %c1_24 = arith.constant 1 : index
    %37 = memref.load %arg1[%c1_24] : memref<81xf32, #tpu.memory_space<smem>>
    %38 = vector.broadcast %37 : f32 to vector<16x20xf32>
    %39 = arith.mulf %38, %36 : vector<16x20xf32>
    %40 = arith.addf %26, %39 : vector<16x20xf32>
    %c28 = arith.constant 28 : index
    %41 = memref.load %arg1[%c28] : memref<81xf32, #tpu.memory_space<smem>>
    %42 = vector.broadcast %41 : f32 to vector<16x20xf32>
    %43 = arith.mulf %42, %36 : vector<16x20xf32>
    %44 = arith.addf %30, %43 : vector<16x20xf32>
    %c55 = arith.constant 55 : index
    %45 = memref.load %arg1[%c55] : memref<81xf32, #tpu.memory_space<smem>>
    %46 = vector.broadcast %45 : f32 to vector<16x20xf32>
    %47 = arith.mulf %46, %36 : vector<16x20xf32>
    %48 = arith.addf %34, %47 : vector<16x20xf32>
    %49 = vector.extract_strided_slice %17 {offsets = [0, 0, 2], sizes = [1, 16, 20], strides = [1, 1, 1]} : vector<3x18x22xf32> to vector<1x16x20xf32>
    %50 = vector.shape_cast %49 : vector<1x16x20xf32> to vector<16x20xf32>
    %c2_25 = arith.constant 2 : index
    %51 = memref.load %arg1[%c2_25] : memref<81xf32, #tpu.memory_space<smem>>
    %52 = vector.broadcast %51 : f32 to vector<16x20xf32>
    %53 = arith.mulf %52, %50 : vector<16x20xf32>
    %54 = arith.addf %40, %53 : vector<16x20xf32>
    %c29 = arith.constant 29 : index
    %55 = memref.load %arg1[%c29] : memref<81xf32, #tpu.memory_space<smem>>
    %56 = vector.broadcast %55 : f32 to vector<16x20xf32>
    %57 = arith.mulf %56, %50 : vector<16x20xf32>
    %58 = arith.addf %44, %57 : vector<16x20xf32>
    %c56 = arith.constant 56 : index
    %59 = memref.load %arg1[%c56] : memref<81xf32, #tpu.memory_space<smem>>
    %60 = vector.broadcast %59 : f32 to vector<16x20xf32>
    %61 = arith.mulf %60, %50 : vector<16x20xf32>
    %62 = arith.addf %48, %61 : vector<16x20xf32>
    %63 = vector.extract_strided_slice %17 {offsets = [0, 1, 0], sizes = [1, 16, 20], strides = [1, 1, 1]} : vector<3x18x22xf32> to vector<1x16x20xf32>
    %64 = vector.shape_cast %63 : vector<1x16x20xf32> to vector<16x20xf32>
    %c3_26 = arith.constant 3 : index
    %65 = memref.load %arg1[%c3_26] : memref<81xf32, #tpu.memory_space<smem>>
    %66 = vector.broadcast %65 : f32 to vector<16x20xf32>
    %67 = arith.mulf %66, %64 : vector<16x20xf32>
    %68 = arith.addf %54, %67 : vector<16x20xf32>
    %c30 = arith.constant 30 : index
    %69 = memref.load %arg1[%c30] : memref<81xf32, #tpu.memory_space<smem>>
    %70 = vector.broadcast %69 : f32 to vector<16x20xf32>
    %71 = arith.mulf %70, %64 : vector<16x20xf32>
    %72 = arith.addf %58, %71 : vector<16x20xf32>
    %c57 = arith.constant 57 : index
    %73 = memref.load %arg1[%c57] : memref<81xf32, #tpu.memory_space<smem>>
    %74 = vector.broadcast %73 : f32 to vector<16x20xf32>
    %75 = arith.mulf %74, %64 : vector<16x20xf32>
    %76 = arith.addf %62, %75 : vector<16x20xf32>
    %77 = vector.extract_strided_slice %17 {offsets = [0, 1, 1], sizes = [1, 16, 20], strides = [1, 1, 1]} : vector<3x18x22xf32> to vector<1x16x20xf32>
    %78 = vector.shape_cast %77 : vector<1x16x20xf32> to vector<16x20xf32>
    %c4 = arith.constant 4 : index
    %79 = memref.load %arg1[%c4] : memref<81xf32, #tpu.memory_space<smem>>
    %80 = vector.broadcast %79 : f32 to vector<16x20xf32>
    %81 = arith.mulf %80, %78 : vector<16x20xf32>
    %82 = arith.addf %68, %81 : vector<16x20xf32>
    %c31 = arith.constant 31 : index
    %83 = memref.load %arg1[%c31] : memref<81xf32, #tpu.memory_space<smem>>
    %84 = vector.broadcast %83 : f32 to vector<16x20xf32>
    %85 = arith.mulf %84, %78 : vector<16x20xf32>
    %86 = arith.addf %72, %85 : vector<16x20xf32>
    %c58 = arith.constant 58 : index
    %87 = memref.load %arg1[%c58] : memref<81xf32, #tpu.memory_space<smem>>
    %88 = vector.broadcast %87 : f32 to vector<16x20xf32>
    %89 = arith.mulf %88, %78 : vector<16x20xf32>
    %90 = arith.addf %76, %89 : vector<16x20xf32>
    %91 = vector.extract_strided_slice %17 {offsets = [0, 1, 2], sizes = [1, 16, 20], strides = [1, 1, 1]} : vector<3x18x22xf32> to vector<1x16x20xf32>
    %92 = vector.shape_cast %91 : vector<1x16x20xf32> to vector<16x20xf32>
    %c5 = arith.constant 5 : index
    %93 = memref.load %arg1[%c5] : memref<81xf32, #tpu.memory_space<smem>>
    %94 = vector.broadcast %93 : f32 to vector<16x20xf32>
    %95 = arith.mulf %94, %92 : vector<16x20xf32>
    %96 = arith.addf %82, %95 : vector<16x20xf32>
    %c32 = arith.constant 32 : index
    %97 = memref.load %arg1[%c32] : memref<81xf32, #tpu.memory_space<smem>>
    %98 = vector.broadcast %97 : f32 to vector<16x20xf32>
    %99 = arith.mulf %98, %92 : vector<16x20xf32>
    %100 = arith.addf %86, %99 : vector<16x20xf32>
    %c59 = arith.constant 59 : index
    %101 = memref.load %arg1[%c59] : memref<81xf32, #tpu.memory_space<smem>>
    %102 = vector.broadcast %101 : f32 to vector<16x20xf32>
    %103 = arith.mulf %102, %92 : vector<16x20xf32>
    %104 = arith.addf %90, %103 : vector<16x20xf32>
    %105 = vector.extract_strided_slice %17 {offsets = [0, 2, 0], sizes = [1, 16, 20], strides = [1, 1, 1]} : vector<3x18x22xf32> to vector<1x16x20xf32>
    %106 = vector.shape_cast %105 : vector<1x16x20xf32> to vector<16x20xf32>
    %c6 = arith.constant 6 : index
    %107 = memref.load %arg1[%c6] : memref<81xf32, #tpu.memory_space<smem>>
    %108 = vector.broadcast %107 : f32 to vector<16x20xf32>
    %109 = arith.mulf %108, %106 : vector<16x20xf32>
    %110 = arith.addf %96, %109 : vector<16x20xf32>
    %c33 = arith.constant 33 : index
    %111 = memref.load %arg1[%c33] : memref<81xf32, #tpu.memory_space<smem>>
    %112 = vector.broadcast %111 : f32 to vector<16x20xf32>
    %113 = arith.mulf %112, %106 : vector<16x20xf32>
    %114 = arith.addf %100, %113 : vector<16x20xf32>
    %c60 = arith.constant 60 : index
    %115 = memref.load %arg1[%c60] : memref<81xf32, #tpu.memory_space<smem>>
    %116 = vector.broadcast %115 : f32 to vector<16x20xf32>
    %117 = arith.mulf %116, %106 : vector<16x20xf32>
    %118 = arith.addf %104, %117 : vector<16x20xf32>
    %119 = vector.extract_strided_slice %17 {offsets = [0, 2, 1], sizes = [1, 16, 20], strides = [1, 1, 1]} : vector<3x18x22xf32> to vector<1x16x20xf32>
    %120 = vector.shape_cast %119 : vector<1x16x20xf32> to vector<16x20xf32>
    %c7 = arith.constant 7 : index
    %121 = memref.load %arg1[%c7] : memref<81xf32, #tpu.memory_space<smem>>
    %122 = vector.broadcast %121 : f32 to vector<16x20xf32>
    %123 = arith.mulf %122, %120 : vector<16x20xf32>
    %124 = arith.addf %110, %123 : vector<16x20xf32>
    %c34 = arith.constant 34 : index
    %125 = memref.load %arg1[%c34] : memref<81xf32, #tpu.memory_space<smem>>
    %126 = vector.broadcast %125 : f32 to vector<16x20xf32>
    %127 = arith.mulf %126, %120 : vector<16x20xf32>
    %128 = arith.addf %114, %127 : vector<16x20xf32>
    %c61 = arith.constant 61 : index
    %129 = memref.load %arg1[%c61] : memref<81xf32, #tpu.memory_space<smem>>
    %130 = vector.broadcast %129 : f32 to vector<16x20xf32>
    %131 = arith.mulf %130, %120 : vector<16x20xf32>
    %132 = arith.addf %118, %131 : vector<16x20xf32>
    %133 = vector.extract_strided_slice %17 {offsets = [0, 2, 2], sizes = [1, 16, 20], strides = [1, 1, 1]} : vector<3x18x22xf32> to vector<1x16x20xf32>
    %134 = vector.shape_cast %133 : vector<1x16x20xf32> to vector<16x20xf32>
    %c8 = arith.constant 8 : index
    %135 = memref.load %arg1[%c8] : memref<81xf32, #tpu.memory_space<smem>>
    %136 = vector.broadcast %135 : f32 to vector<16x20xf32>
    %137 = arith.mulf %136, %134 : vector<16x20xf32>
    %138 = arith.addf %124, %137 : vector<16x20xf32>
    %c35 = arith.constant 35 : index
    %139 = memref.load %arg1[%c35] : memref<81xf32, #tpu.memory_space<smem>>
    %140 = vector.broadcast %139 : f32 to vector<16x20xf32>
    %141 = arith.mulf %140, %134 : vector<16x20xf32>
    %142 = arith.addf %128, %141 : vector<16x20xf32>
    %c62 = arith.constant 62 : index
    %143 = memref.load %arg1[%c62] : memref<81xf32, #tpu.memory_space<smem>>
    %144 = vector.broadcast %143 : f32 to vector<16x20xf32>
    %145 = arith.mulf %144, %134 : vector<16x20xf32>
    %146 = arith.addf %132, %145 : vector<16x20xf32>
    %147 = vector.extract_strided_slice %17 {offsets = [1, 0, 0], sizes = [1, 16, 20], strides = [1, 1, 1]} : vector<3x18x22xf32> to vector<1x16x20xf32>
    %148 = vector.shape_cast %147 : vector<1x16x20xf32> to vector<16x20xf32>
    %c9 = arith.constant 9 : index
    %149 = memref.load %arg1[%c9] : memref<81xf32, #tpu.memory_space<smem>>
    %150 = vector.broadcast %149 : f32 to vector<16x20xf32>
    %151 = arith.mulf %150, %148 : vector<16x20xf32>
    %152 = arith.addf %138, %151 : vector<16x20xf32>
    %c36 = arith.constant 36 : index
    %153 = memref.load %arg1[%c36] : memref<81xf32, #tpu.memory_space<smem>>
    %154 = vector.broadcast %153 : f32 to vector<16x20xf32>
    %155 = arith.mulf %154, %148 : vector<16x20xf32>
    %156 = arith.addf %142, %155 : vector<16x20xf32>
    %c63 = arith.constant 63 : index
    %157 = memref.load %arg1[%c63] : memref<81xf32, #tpu.memory_space<smem>>
    %158 = vector.broadcast %157 : f32 to vector<16x20xf32>
    %159 = arith.mulf %158, %148 : vector<16x20xf32>
    %160 = arith.addf %146, %159 : vector<16x20xf32>
    %161 = vector.extract_strided_slice %17 {offsets = [1, 0, 1], sizes = [1, 16, 20], strides = [1, 1, 1]} : vector<3x18x22xf32> to vector<1x16x20xf32>
    %162 = vector.shape_cast %161 : vector<1x16x20xf32> to vector<16x20xf32>
    %c10 = arith.constant 10 : index
    %163 = memref.load %arg1[%c10] : memref<81xf32, #tpu.memory_space<smem>>
    %164 = vector.broadcast %163 : f32 to vector<16x20xf32>
    %165 = arith.mulf %164, %162 : vector<16x20xf32>
    %166 = arith.addf %152, %165 : vector<16x20xf32>
    %c37 = arith.constant 37 : index
    %167 = memref.load %arg1[%c37] : memref<81xf32, #tpu.memory_space<smem>>
    %168 = vector.broadcast %167 : f32 to vector<16x20xf32>
    %169 = arith.mulf %168, %162 : vector<16x20xf32>
    %170 = arith.addf %156, %169 : vector<16x20xf32>
    %c64 = arith.constant 64 : index
    %171 = memref.load %arg1[%c64] : memref<81xf32, #tpu.memory_space<smem>>
    %172 = vector.broadcast %171 : f32 to vector<16x20xf32>
    %173 = arith.mulf %172, %162 : vector<16x20xf32>
    %174 = arith.addf %160, %173 : vector<16x20xf32>
    %175 = vector.extract_strided_slice %17 {offsets = [1, 0, 2], sizes = [1, 16, 20], strides = [1, 1, 1]} : vector<3x18x22xf32> to vector<1x16x20xf32>
    %176 = vector.shape_cast %175 : vector<1x16x20xf32> to vector<16x20xf32>
    %c11 = arith.constant 11 : index
    %177 = memref.load %arg1[%c11] : memref<81xf32, #tpu.memory_space<smem>>
    %178 = vector.broadcast %177 : f32 to vector<16x20xf32>
    %179 = arith.mulf %178, %176 : vector<16x20xf32>
    %180 = arith.addf %166, %179 : vector<16x20xf32>
    %c38 = arith.constant 38 : index
    %181 = memref.load %arg1[%c38] : memref<81xf32, #tpu.memory_space<smem>>
    %182 = vector.broadcast %181 : f32 to vector<16x20xf32>
    %183 = arith.mulf %182, %176 : vector<16x20xf32>
    %184 = arith.addf %170, %183 : vector<16x20xf32>
    %c65 = arith.constant 65 : index
    %185 = memref.load %arg1[%c65] : memref<81xf32, #tpu.memory_space<smem>>
    %186 = vector.broadcast %185 : f32 to vector<16x20xf32>
    %187 = arith.mulf %186, %176 : vector<16x20xf32>
    %188 = arith.addf %174, %187 : vector<16x20xf32>
    %189 = vector.extract_strided_slice %17 {offsets = [1, 1, 0], sizes = [1, 16, 20], strides = [1, 1, 1]} : vector<3x18x22xf32> to vector<1x16x20xf32>
    %190 = vector.shape_cast %189 : vector<1x16x20xf32> to vector<16x20xf32>
    %c12 = arith.constant 12 : index
    %191 = memref.load %arg1[%c12] : memref<81xf32, #tpu.memory_space<smem>>
    %192 = vector.broadcast %191 : f32 to vector<16x20xf32>
    %193 = arith.mulf %192, %190 : vector<16x20xf32>
    %194 = arith.addf %180, %193 : vector<16x20xf32>
    %c39 = arith.constant 39 : index
    %195 = memref.load %arg1[%c39] : memref<81xf32, #tpu.memory_space<smem>>
    %196 = vector.broadcast %195 : f32 to vector<16x20xf32>
    %197 = arith.mulf %196, %190 : vector<16x20xf32>
    %198 = arith.addf %184, %197 : vector<16x20xf32>
    %c66 = arith.constant 66 : index
    %199 = memref.load %arg1[%c66] : memref<81xf32, #tpu.memory_space<smem>>
    %200 = vector.broadcast %199 : f32 to vector<16x20xf32>
    %201 = arith.mulf %200, %190 : vector<16x20xf32>
    %202 = arith.addf %188, %201 : vector<16x20xf32>
    %203 = vector.extract_strided_slice %17 {offsets = [1, 1, 1], sizes = [1, 16, 20], strides = [1, 1, 1]} : vector<3x18x22xf32> to vector<1x16x20xf32>
    %204 = vector.shape_cast %203 : vector<1x16x20xf32> to vector<16x20xf32>
    %c13 = arith.constant 13 : index
    %205 = memref.load %arg1[%c13] : memref<81xf32, #tpu.memory_space<smem>>
    %206 = vector.broadcast %205 : f32 to vector<16x20xf32>
    %207 = arith.mulf %206, %204 : vector<16x20xf32>
    %208 = arith.addf %194, %207 : vector<16x20xf32>
    %c40 = arith.constant 40 : index
    %209 = memref.load %arg1[%c40] : memref<81xf32, #tpu.memory_space<smem>>
    %210 = vector.broadcast %209 : f32 to vector<16x20xf32>
    %211 = arith.mulf %210, %204 : vector<16x20xf32>
    %212 = arith.addf %198, %211 : vector<16x20xf32>
    %c67 = arith.constant 67 : index
    %213 = memref.load %arg1[%c67] : memref<81xf32, #tpu.memory_space<smem>>
    %214 = vector.broadcast %213 : f32 to vector<16x20xf32>
    %215 = arith.mulf %214, %204 : vector<16x20xf32>
    %216 = arith.addf %202, %215 : vector<16x20xf32>
    %217 = vector.extract_strided_slice %17 {offsets = [1, 1, 2], sizes = [1, 16, 20], strides = [1, 1, 1]} : vector<3x18x22xf32> to vector<1x16x20xf32>
    %218 = vector.shape_cast %217 : vector<1x16x20xf32> to vector<16x20xf32>
    %c14 = arith.constant 14 : index
    %219 = memref.load %arg1[%c14] : memref<81xf32, #tpu.memory_space<smem>>
    %220 = vector.broadcast %219 : f32 to vector<16x20xf32>
    %221 = arith.mulf %220, %218 : vector<16x20xf32>
    %222 = arith.addf %208, %221 : vector<16x20xf32>
    %c41 = arith.constant 41 : index
    %223 = memref.load %arg1[%c41] : memref<81xf32, #tpu.memory_space<smem>>
    %224 = vector.broadcast %223 : f32 to vector<16x20xf32>
    %225 = arith.mulf %224, %218 : vector<16x20xf32>
    %226 = arith.addf %212, %225 : vector<16x20xf32>
    %c68 = arith.constant 68 : index
    %227 = memref.load %arg1[%c68] : memref<81xf32, #tpu.memory_space<smem>>
    %228 = vector.broadcast %227 : f32 to vector<16x20xf32>
    %229 = arith.mulf %228, %218 : vector<16x20xf32>
    %230 = arith.addf %216, %229 : vector<16x20xf32>
    %231 = vector.extract_strided_slice %17 {offsets = [1, 2, 0], sizes = [1, 16, 20], strides = [1, 1, 1]} : vector<3x18x22xf32> to vector<1x16x20xf32>
    %232 = vector.shape_cast %231 : vector<1x16x20xf32> to vector<16x20xf32>
    %c15 = arith.constant 15 : index
    %233 = memref.load %arg1[%c15] : memref<81xf32, #tpu.memory_space<smem>>
    %234 = vector.broadcast %233 : f32 to vector<16x20xf32>
    %235 = arith.mulf %234, %232 : vector<16x20xf32>
    %236 = arith.addf %222, %235 : vector<16x20xf32>
    %c42 = arith.constant 42 : index
    %237 = memref.load %arg1[%c42] : memref<81xf32, #tpu.memory_space<smem>>
    %238 = vector.broadcast %237 : f32 to vector<16x20xf32>
    %239 = arith.mulf %238, %232 : vector<16x20xf32>
    %240 = arith.addf %226, %239 : vector<16x20xf32>
    %c69 = arith.constant 69 : index
    %241 = memref.load %arg1[%c69] : memref<81xf32, #tpu.memory_space<smem>>
    %242 = vector.broadcast %241 : f32 to vector<16x20xf32>
    %243 = arith.mulf %242, %232 : vector<16x20xf32>
    %244 = arith.addf %230, %243 : vector<16x20xf32>
    %245 = vector.extract_strided_slice %17 {offsets = [1, 2, 1], sizes = [1, 16, 20], strides = [1, 1, 1]} : vector<3x18x22xf32> to vector<1x16x20xf32>
    %246 = vector.shape_cast %245 : vector<1x16x20xf32> to vector<16x20xf32>
    %c16 = arith.constant 16 : index
    %247 = memref.load %arg1[%c16] : memref<81xf32, #tpu.memory_space<smem>>
    %248 = vector.broadcast %247 : f32 to vector<16x20xf32>
    %249 = arith.mulf %248, %246 : vector<16x20xf32>
    %250 = arith.addf %236, %249 : vector<16x20xf32>
    %c43 = arith.constant 43 : index
    %251 = memref.load %arg1[%c43] : memref<81xf32, #tpu.memory_space<smem>>
    %252 = vector.broadcast %251 : f32 to vector<16x20xf32>
    %253 = arith.mulf %252, %246 : vector<16x20xf32>
    %254 = arith.addf %240, %253 : vector<16x20xf32>
    %c70 = arith.constant 70 : index
    %255 = memref.load %arg1[%c70] : memref<81xf32, #tpu.memory_space<smem>>
    %256 = vector.broadcast %255 : f32 to vector<16x20xf32>
    %257 = arith.mulf %256, %246 : vector<16x20xf32>
    %258 = arith.addf %244, %257 : vector<16x20xf32>
    %259 = vector.extract_strided_slice %17 {offsets = [1, 2, 2], sizes = [1, 16, 20], strides = [1, 1, 1]} : vector<3x18x22xf32> to vector<1x16x20xf32>
    %260 = vector.shape_cast %259 : vector<1x16x20xf32> to vector<16x20xf32>
    %c17 = arith.constant 17 : index
    %261 = memref.load %arg1[%c17] : memref<81xf32, #tpu.memory_space<smem>>
    %262 = vector.broadcast %261 : f32 to vector<16x20xf32>
    %263 = arith.mulf %262, %260 : vector<16x20xf32>
    %264 = arith.addf %250, %263 : vector<16x20xf32>
    %c44 = arith.constant 44 : index
    %265 = memref.load %arg1[%c44] : memref<81xf32, #tpu.memory_space<smem>>
    %266 = vector.broadcast %265 : f32 to vector<16x20xf32>
    %267 = arith.mulf %266, %260 : vector<16x20xf32>
    %268 = arith.addf %254, %267 : vector<16x20xf32>
    %c71 = arith.constant 71 : index
    %269 = memref.load %arg1[%c71] : memref<81xf32, #tpu.memory_space<smem>>
    %270 = vector.broadcast %269 : f32 to vector<16x20xf32>
    %271 = arith.mulf %270, %260 : vector<16x20xf32>
    %272 = arith.addf %258, %271 : vector<16x20xf32>
    %273 = vector.extract_strided_slice %17 {offsets = [2, 0, 0], sizes = [1, 16, 20], strides = [1, 1, 1]} : vector<3x18x22xf32> to vector<1x16x20xf32>
    %274 = vector.shape_cast %273 : vector<1x16x20xf32> to vector<16x20xf32>
    %c18 = arith.constant 18 : index
    %275 = memref.load %arg1[%c18] : memref<81xf32, #tpu.memory_space<smem>>
    %276 = vector.broadcast %275 : f32 to vector<16x20xf32>
    %277 = arith.mulf %276, %274 : vector<16x20xf32>
    %278 = arith.addf %264, %277 : vector<16x20xf32>
    %c45 = arith.constant 45 : index
    %279 = memref.load %arg1[%c45] : memref<81xf32, #tpu.memory_space<smem>>
    %280 = vector.broadcast %279 : f32 to vector<16x20xf32>
    %281 = arith.mulf %280, %274 : vector<16x20xf32>
    %282 = arith.addf %268, %281 : vector<16x20xf32>
    %c72 = arith.constant 72 : index
    %283 = memref.load %arg1[%c72] : memref<81xf32, #tpu.memory_space<smem>>
    %284 = vector.broadcast %283 : f32 to vector<16x20xf32>
    %285 = arith.mulf %284, %274 : vector<16x20xf32>
    %286 = arith.addf %272, %285 : vector<16x20xf32>
    %287 = vector.extract_strided_slice %17 {offsets = [2, 0, 1], sizes = [1, 16, 20], strides = [1, 1, 1]} : vector<3x18x22xf32> to vector<1x16x20xf32>
    %288 = vector.shape_cast %287 : vector<1x16x20xf32> to vector<16x20xf32>
    %c19 = arith.constant 19 : index
    %289 = memref.load %arg1[%c19] : memref<81xf32, #tpu.memory_space<smem>>
    %290 = vector.broadcast %289 : f32 to vector<16x20xf32>
    %291 = arith.mulf %290, %288 : vector<16x20xf32>
    %292 = arith.addf %278, %291 : vector<16x20xf32>
    %c46 = arith.constant 46 : index
    %293 = memref.load %arg1[%c46] : memref<81xf32, #tpu.memory_space<smem>>
    %294 = vector.broadcast %293 : f32 to vector<16x20xf32>
    %295 = arith.mulf %294, %288 : vector<16x20xf32>
    %296 = arith.addf %282, %295 : vector<16x20xf32>
    %c73 = arith.constant 73 : index
    %297 = memref.load %arg1[%c73] : memref<81xf32, #tpu.memory_space<smem>>
    %298 = vector.broadcast %297 : f32 to vector<16x20xf32>
    %299 = arith.mulf %298, %288 : vector<16x20xf32>
    %300 = arith.addf %286, %299 : vector<16x20xf32>
    %301 = vector.extract_strided_slice %17 {offsets = [2, 0, 2], sizes = [1, 16, 20], strides = [1, 1, 1]} : vector<3x18x22xf32> to vector<1x16x20xf32>
    %302 = vector.shape_cast %301 : vector<1x16x20xf32> to vector<16x20xf32>
    %c20 = arith.constant 20 : index
    %303 = memref.load %arg1[%c20] : memref<81xf32, #tpu.memory_space<smem>>
    %304 = vector.broadcast %303 : f32 to vector<16x20xf32>
    %305 = arith.mulf %304, %302 : vector<16x20xf32>
    %306 = arith.addf %292, %305 : vector<16x20xf32>
    %c47 = arith.constant 47 : index
    %307 = memref.load %arg1[%c47] : memref<81xf32, #tpu.memory_space<smem>>
    %308 = vector.broadcast %307 : f32 to vector<16x20xf32>
    %309 = arith.mulf %308, %302 : vector<16x20xf32>
    %310 = arith.addf %296, %309 : vector<16x20xf32>
    %c74 = arith.constant 74 : index
    %311 = memref.load %arg1[%c74] : memref<81xf32, #tpu.memory_space<smem>>
    %312 = vector.broadcast %311 : f32 to vector<16x20xf32>
    %313 = arith.mulf %312, %302 : vector<16x20xf32>
    %314 = arith.addf %300, %313 : vector<16x20xf32>
    %315 = vector.extract_strided_slice %17 {offsets = [2, 1, 0], sizes = [1, 16, 20], strides = [1, 1, 1]} : vector<3x18x22xf32> to vector<1x16x20xf32>
    %316 = vector.shape_cast %315 : vector<1x16x20xf32> to vector<16x20xf32>
    %c21 = arith.constant 21 : index
    %317 = memref.load %arg1[%c21] : memref<81xf32, #tpu.memory_space<smem>>
    %318 = vector.broadcast %317 : f32 to vector<16x20xf32>
    %319 = arith.mulf %318, %316 : vector<16x20xf32>
    %320 = arith.addf %306, %319 : vector<16x20xf32>
    %c48 = arith.constant 48 : index
    %321 = memref.load %arg1[%c48] : memref<81xf32, #tpu.memory_space<smem>>
    %322 = vector.broadcast %321 : f32 to vector<16x20xf32>
    %323 = arith.mulf %322, %316 : vector<16x20xf32>
    %324 = arith.addf %310, %323 : vector<16x20xf32>
    %c75 = arith.constant 75 : index
    %325 = memref.load %arg1[%c75] : memref<81xf32, #tpu.memory_space<smem>>
    %326 = vector.broadcast %325 : f32 to vector<16x20xf32>
    %327 = arith.mulf %326, %316 : vector<16x20xf32>
    %328 = arith.addf %314, %327 : vector<16x20xf32>
    %329 = vector.extract_strided_slice %17 {offsets = [2, 1, 1], sizes = [1, 16, 20], strides = [1, 1, 1]} : vector<3x18x22xf32> to vector<1x16x20xf32>
    %330 = vector.shape_cast %329 : vector<1x16x20xf32> to vector<16x20xf32>
    %c22 = arith.constant 22 : index
    %331 = memref.load %arg1[%c22] : memref<81xf32, #tpu.memory_space<smem>>
    %332 = vector.broadcast %331 : f32 to vector<16x20xf32>
    %333 = arith.mulf %332, %330 : vector<16x20xf32>
    %334 = arith.addf %320, %333 : vector<16x20xf32>
    %c49 = arith.constant 49 : index
    %335 = memref.load %arg1[%c49] : memref<81xf32, #tpu.memory_space<smem>>
    %336 = vector.broadcast %335 : f32 to vector<16x20xf32>
    %337 = arith.mulf %336, %330 : vector<16x20xf32>
    %338 = arith.addf %324, %337 : vector<16x20xf32>
    %c76 = arith.constant 76 : index
    %339 = memref.load %arg1[%c76] : memref<81xf32, #tpu.memory_space<smem>>
    %340 = vector.broadcast %339 : f32 to vector<16x20xf32>
    %341 = arith.mulf %340, %330 : vector<16x20xf32>
    %342 = arith.addf %328, %341 : vector<16x20xf32>
    %343 = vector.extract_strided_slice %17 {offsets = [2, 1, 2], sizes = [1, 16, 20], strides = [1, 1, 1]} : vector<3x18x22xf32> to vector<1x16x20xf32>
    %344 = vector.shape_cast %343 : vector<1x16x20xf32> to vector<16x20xf32>
    %c23 = arith.constant 23 : index
    %345 = memref.load %arg1[%c23] : memref<81xf32, #tpu.memory_space<smem>>
    %346 = vector.broadcast %345 : f32 to vector<16x20xf32>
    %347 = arith.mulf %346, %344 : vector<16x20xf32>
    %348 = arith.addf %334, %347 : vector<16x20xf32>
    %c50 = arith.constant 50 : index
    %349 = memref.load %arg1[%c50] : memref<81xf32, #tpu.memory_space<smem>>
    %350 = vector.broadcast %349 : f32 to vector<16x20xf32>
    %351 = arith.mulf %350, %344 : vector<16x20xf32>
    %352 = arith.addf %338, %351 : vector<16x20xf32>
    %c77 = arith.constant 77 : index
    %353 = memref.load %arg1[%c77] : memref<81xf32, #tpu.memory_space<smem>>
    %354 = vector.broadcast %353 : f32 to vector<16x20xf32>
    %355 = arith.mulf %354, %344 : vector<16x20xf32>
    %356 = arith.addf %342, %355 : vector<16x20xf32>
    %357 = vector.extract_strided_slice %17 {offsets = [2, 2, 0], sizes = [1, 16, 20], strides = [1, 1, 1]} : vector<3x18x22xf32> to vector<1x16x20xf32>
    %358 = vector.shape_cast %357 : vector<1x16x20xf32> to vector<16x20xf32>
    %c24 = arith.constant 24 : index
    %359 = memref.load %arg1[%c24] : memref<81xf32, #tpu.memory_space<smem>>
    %360 = vector.broadcast %359 : f32 to vector<16x20xf32>
    %361 = arith.mulf %360, %358 : vector<16x20xf32>
    %362 = arith.addf %348, %361 : vector<16x20xf32>
    %c51 = arith.constant 51 : index
    %363 = memref.load %arg1[%c51] : memref<81xf32, #tpu.memory_space<smem>>
    %364 = vector.broadcast %363 : f32 to vector<16x20xf32>
    %365 = arith.mulf %364, %358 : vector<16x20xf32>
    %366 = arith.addf %352, %365 : vector<16x20xf32>
    %c78 = arith.constant 78 : index
    %367 = memref.load %arg1[%c78] : memref<81xf32, #tpu.memory_space<smem>>
    %368 = vector.broadcast %367 : f32 to vector<16x20xf32>
    %369 = arith.mulf %368, %358 : vector<16x20xf32>
    %370 = arith.addf %356, %369 : vector<16x20xf32>
    %371 = vector.extract_strided_slice %17 {offsets = [2, 2, 1], sizes = [1, 16, 20], strides = [1, 1, 1]} : vector<3x18x22xf32> to vector<1x16x20xf32>
    %372 = vector.shape_cast %371 : vector<1x16x20xf32> to vector<16x20xf32>
    %c25 = arith.constant 25 : index
    %373 = memref.load %arg1[%c25] : memref<81xf32, #tpu.memory_space<smem>>
    %374 = vector.broadcast %373 : f32 to vector<16x20xf32>
    %375 = arith.mulf %374, %372 : vector<16x20xf32>
    %376 = arith.addf %362, %375 : vector<16x20xf32>
    %c52 = arith.constant 52 : index
    %377 = memref.load %arg1[%c52] : memref<81xf32, #tpu.memory_space<smem>>
    %378 = vector.broadcast %377 : f32 to vector<16x20xf32>
    %379 = arith.mulf %378, %372 : vector<16x20xf32>
    %380 = arith.addf %366, %379 : vector<16x20xf32>
    %c79 = arith.constant 79 : index
    %381 = memref.load %arg1[%c79] : memref<81xf32, #tpu.memory_space<smem>>
    %382 = vector.broadcast %381 : f32 to vector<16x20xf32>
    %383 = arith.mulf %382, %372 : vector<16x20xf32>
    %384 = arith.addf %370, %383 : vector<16x20xf32>
    %385 = vector.extract_strided_slice %17 {offsets = [2, 2, 2], sizes = [1, 16, 20], strides = [1, 1, 1]} : vector<3x18x22xf32> to vector<1x16x20xf32>
    %386 = vector.shape_cast %385 : vector<1x16x20xf32> to vector<16x20xf32>
    %c26 = arith.constant 26 : index
    %387 = memref.load %arg1[%c26] : memref<81xf32, #tpu.memory_space<smem>>
    %388 = vector.broadcast %387 : f32 to vector<16x20xf32>
    %389 = arith.mulf %388, %386 : vector<16x20xf32>
    %390 = arith.addf %376, %389 : vector<16x20xf32>
    %c53 = arith.constant 53 : index
    %391 = memref.load %arg1[%c53] : memref<81xf32, #tpu.memory_space<smem>>
    %392 = vector.broadcast %391 : f32 to vector<16x20xf32>
    %393 = arith.mulf %392, %386 : vector<16x20xf32>
    %394 = arith.addf %380, %393 : vector<16x20xf32>
    %c80 = arith.constant 80 : index
    %395 = memref.load %arg1[%c80] : memref<81xf32, #tpu.memory_space<smem>>
    %396 = vector.broadcast %395 : f32 to vector<16x20xf32>
    %397 = arith.mulf %396, %386 : vector<16x20xf32>
    %398 = arith.addf %384, %397 : vector<16x20xf32>
    %cst_27 = arith.constant 0.000000e+00 : f32
    %399 = vector.broadcast %cst_27 : f32 to vector<16x20xf32>
    %cst_28 = arith.constant 0.000000e+00 : f32
    %400 = vector.broadcast %cst_28 : f32 to vector<16x20xf32>
    %401 = arith.maximumf %390, %400 : vector<16x20xf32>
    %402 = arith.addf %399, %401 : vector<16x20xf32>
    %cst_29 = arith.constant 0.000000e+00 : f32
    %403 = vector.broadcast %cst_29 : f32 to vector<16x20xf32>
    %404 = arith.maximumf %394, %403 : vector<16x20xf32>
    %405 = arith.addf %402, %404 : vector<16x20xf32>
    %cst_30 = arith.constant 0.000000e+00 : f32
    %406 = vector.broadcast %cst_30 : f32 to vector<16x20xf32>
    %407 = arith.maximumf %398, %406 : vector<16x20xf32>
    %408 = arith.addf %405, %407 : vector<16x20xf32>
    %409 = vector.shape_cast %408 : vector<16x20xf32> to vector<1x16x20xf32>
    %cst_31 = arith.constant dense<0.000000e+00> : vector<1xf32>
    %410 = vector.multi_reduction <add>, %409, %cst_31 [1, 2] : vector<1x16x20xf32> to vector<1xf32>
    %411 = vector.shape_cast %410 : vector<1xf32> to vector<1x1x1xf32>
    %412 = vector.extract %411[0, 0, 0] : f32 from vector<1x1x1xf32>
    %cst_32 = arith.constant 1.000000e-01 : f32
    %413 = arith.mulf %cst_32, %412 : f32
    %414 = vector.broadcast %413 : f32 to vector<1x1xf32>
    %c0_33 = arith.constant 0 : index
    %c0_34 = arith.constant 0 : index
    %415 = vector.load %arg2[%c0_33, %c0_34] : memref<1x1xf32, #tpu.memory_space<vmem>>, vector<1x1xf32>
    tpu.vector_store %arg2[%c0_33, %c0_34], %414 {strides = array<i32>} : memref<1x1xf32, #tpu.memory_space<vmem>>, vector<1x1xf32>,
    return
  }
}

</mosaic_0001>

<llo_original>
// kernel: tpu_custom_call.1
$region0: #{tpu_custom_call.1}
  #allocation0 [shape = 'u32[]', space=smem, size = 0x4, offset = 0x4, fixed_abs, tag = 'smem constant byte address 0x4 - core index']
  #allocation1 [shape = 'u32[144,128]{1,0:T(1,128)}', space=vmem, size = 0x12000, scoped, tag = 'internal scratch']
  #allocation2 [shape = 'f32[3,18,22]{2,1,0:T(8,128)}', space=vmem, size = 0x9000, scoped, tag = 'scratch operand']
  %s0 = inlined_call_operand.hbm [shape: f32[3,16,16], index: 0, kind: input, shape index: {}]
  %s1 = inlined_call_operand.vmem [shape: f32[81], index: 1, kind: input, shape index: {}]
  %s2 = inlined_call_operand.hbm [shape: f32[1,1], index: 2, kind: output, shape index: {}]
  %s3 = sld [smem:[#allocation0]]
  $region26: #{tpu_custom_call.1} parent=0
    _
  %s5 = ssub.s32 1, %s3
  %s6 = scalar_select 0, %s5, %s3
  $region1: #{tpu_custom_call.1} parent=0
    #allocation3 [shape = 'u8[24576]{0}', space=vmem, size = 0x6000, scoped, tag = 'input window, operand 0, single buffered']
    #allocation4 [shape = 's32[1]{0}', space=sflag, size = 0x4, scoped, tag = 'scoped memory for tpu_custom_call.1']
    #allocation5 [shape = 's32[1]{0}', space=sflag, size = 0x4, scoped, tag = 'scoped memory for tpu_custom_call.1']
    #allocation6 [shape = 's32[1]{0}', space=sflag, size = 0x4, scoped, tag = 'scoped memory for tpu_custom_call.1']
    #allocation7 [shape = 'u8[512]{0}', space=smem, size = 0x200, scoped, tag = 'input window, operand 1, single buffered']
    #allocation8 [shape = 'u8[512]{0}', space=vmem, size = 0x400, scoped, tag = 'output window, operand 0, single buffered']
    %7 = vsyncpa [#allocation4], 0
    %8 = vsyncpa [#allocation6], 0
    %9 = vsyncpa [#allocation5], 0
    // Predicated region
    $region2: #{tpu_custom_call.1} parent=1 // pred_check
      _
    $region3: #{tpu_custom_call.1} parent=1 // pred_check_branch
      %11 = sbr.rel (0) target = $region5
    $region4: #{tpu_custom_call.1} parent=1 // pred_region
      %s13 = ssub.s32 768, 768
      %14 = vsyncadd [#allocation4], %s13
      %s15 = sshll.u32 [#allocation3], 4
      %s16 = int_to_ptr.vmem [resolvable:$true] %s15
      %21 = dma.hbm_to_vmem [thread:$0]  %s0, 768, %s16, [#allocation4], 128, 128, 8
    $region5: #{tpu_custom_call.1} parent=1 // pred_fallthru
      _
    // Predicated region
    $region6: #{tpu_custom_call.1} parent=1 // pred_check
      _
    $region7: #{tpu_custom_call.1} parent=1 // pred_check_branch
      %23 = sbr.rel (0) target = $region9
    $region8: #{tpu_custom_call.1} parent=1 // pred_region
      %s25 = ssub.s32 16, 16
      %26 = vsyncadd [#allocation6], %s25
      %s28 = sshll.u32 %s1, 4
      %s29 = int_to_ptr.vmem [resolvable:$true] %s28
      %31 = dma.vmem_to_smem %s29, 16, [#allocation7], [#allocation6]
    $region9: #{tpu_custom_call.1} parent=1 // pred_fallthru
      _
    // Predicated region
    $region10: #{tpu_custom_call.1} parent=1 // pred_check
      _
    $region11: #{tpu_custom_call.1} parent=1 // pred_check_branch
      %33 = sbr.rel (0) target = $region13
    $region12: #{tpu_custom_call.1} parent=1 // pred_region
      %34 = dma.done [#allocation4], 768
    $region13: #{tpu_custom_call.1} parent=1 // pred_fallthru
      _
    // Predicated region
    $region14: #{tpu_custom_call.1} parent=1 // pred_check
      _
    $region15: #{tpu_custom_call.1} parent=1 // pred_check_branch
      %36 = sbr.rel (0) target = $region17
    $region16: #{tpu_custom_call.1} parent=1 // pred_region
      %37 = dma.done [#allocation6], 16
    $region17: #{tpu_custom_call.1} parent=1 // pred_fallthru
      _
    %38 = sfence
    %vm39 = vcmask 179200
    %40 = vst.msk [vmem:[#allocation2] sm:$0xff] %vm39, 0.0
    %41 = vst.msk [vmem:[#allocation2 + $0x8] sm:$0xff] %vm39, 0.0
    %vm42 = vcmask 173056
    %43 = vst.msk [vmem:[#allocation2 + $0x10] sm:$0x3] %vm42, 0.0
    %44 = vst.msk [vmem:[#allocation2 + $0x18] sm:$0xff] %vm39, 0.0
    %45 = vst.msk [vmem:[#allocation2 + $0x20] sm:$0xff] %vm39, 0.0
    %46 = vst.msk [vmem:[#allocation2 + $0x28] sm:$0x3] %vm42, 0.0
    %47 = vst.msk [vmem:[#allocation2 + $0x30] sm:$0xff] %vm39, 0.0
    %48 = vst.msk [vmem:[#allocation2 + $0x38] sm:$0xff] %vm39, 0.0
    %49 = vst.msk [vmem:[#allocation2 + $0x40] sm:$0x3] %vm42, 0.0
    %v50 = vld [vmem:[#allocation3] sm:$0xff]
    %v51 = vld [vmem:[#allocation3 + $0x8] sm:$0xff]
    %54 = vrot.lane.b32.xlu0 %v50, 3
    %v55 = vpop.permute.xlu0 %54
    %56 = vrot.lane.b32.xlu0 %v51, 3
    %v57 = vpop.permute.xlu0 %56
    %vm60 = vcmask 154648
    %61 = vst.msk [vmem:[#allocation2 + $0x1] sm:$0xff] %vm60, %v55
    %62 = vst.msk [vmem:[#allocation2 + $0x9] sm:$0xff] %vm60, %v57
    %s63 = scalar_lea.vmem [#allocation3], 16
    %v64 = vld [vmem:[%s63] sm:$0xff]
    %v65 = vld [vmem:[%s63 + $0x8] sm:$0xff]
    %68 = vrot.lane.b32.xlu0 %v64, 3
    %v69 = vpop.permute.xlu0 %68
    %70 = vrot.lane.b32.xlu0 %v65, 3
    %v71 = vpop.permute.xlu0 %70
    %s74 = scalar_lea.vmem [#allocation2], 24
    %75 = vst.msk [vmem:[%s74 + $0x1] sm:$0xff] %vm60, %v69
    %76 = vst.msk [vmem:[%s74 + $0x9] sm:$0xff] %vm60, %v71
    %s77 = scalar_lea.vmem [#allocation3], 32
    %v78 = vld [vmem:[%s77] sm:$0xff]
    %v79 = vld [vmem:[%s77 + $0x8] sm:$0xff]
    %82 = vrot.lane.b32.xlu0 %v78, 3
    %v83 = vpop.permute.xlu0 %82
    %84 = vrot.lane.b32.xlu0 %v79, 3
    %v85 = vpop.permute.xlu0 %84
    %s88 = scalar_lea.vmem [#allocation2], 48
    %89 = vst.msk [vmem:[%s88 + $0x1] sm:$0xff] %vm60, %v83
    %90 = vst.msk [vmem:[%s88 + $0x9] sm:$0xff] %vm60, %v85
    %v91 = vld [vmem:[#allocation2] sm:$0xff]
    %v92 = vld [vmem:[#allocation2 + $0x8] sm:$0xff]
    %v93 = vld [vmem:[#allocation2 + $0x10] sm:$0x3]
    %v94 = vld [vmem:[#allocation2 + $0x18] sm:$0xff]
    %v95 = vld [vmem:[#allocation2 + $0x20] sm:$0xff]
    %v96 = vld [vmem:[#allocation2 + $0x28] sm:$0x3]
    %v97 = vld [vmem:[#allocation2 + $0x30] sm:$0xff]
    %v98 = vld [vmem:[#allocation2 + $0x38] sm:$0xff]
    %v99 = vld [vmem:[#allocation2 + $0x40] sm:$0x3]
    %s100 = sld [smem:[#allocation7]]
    %v101 = vstv %s100
    %v102 = vmul.f32 %v101, %v91
    %v103 = vmul.f32 %v101, %v92
    %v104 = vadd.f32 %v102, 0.0
    %v105 = vadd.f32 %v103, 0.0
    %s106 = sld [smem:[#allocation7 + $0x1b]]
    %v107 = vstv %s106
    %v108 = vmul.f32 %v107, %v91
    %v109 = vmul.f32 %v107, %v92
    %v110 = vadd.f32 %v108, 0.0
    %v111 = vadd.f32 %v109, 0.0
    %s112 = sld [smem:[#allocation7 + $0x36]]
    %v113 = vstv %s112
    %v114 = vmul.f32 %v113, %v91
    %v115 = vmul.f32 %v113, %v92
    %v116 = vadd.f32 %v114, 0.0
    %v117 = vadd.f32 %v115, 0.0
    %s118 = sld [smem:[#allocation7 + $0x1]]
    %v119 = vstv %s118
    %v120 = vmul.f32 %v119, %v91
    %v121 = vmul.f32 %v119, %v92
    %124 = vrot.lane.b32.xlu0 %v120, 127
    %v125 = vpop.permute.xlu0 %124
    %126 = vrot.lane.b32.xlu0 %v121, 127
    %v127 = vpop.permute.xlu0 %126
    %v130 = vadd.f32 %v104, %v125
    %v131 = vadd.f32 %v105, %v127
    %s132 = sld [smem:[#allocation7 + $0x1c]]
    %v133 = vstv %s132
    %v134 = vmul.f32 %v133, %v91
    %v135 = vmul.f32 %v133, %v92
    %138 = vrot.lane.b32.xlu0 %v134, 127
    %v139 = vpop.permute.xlu0 %138
    %140 = vrot.lane.b32.xlu0 %v135, 127
    %v141 = vpop.permute.xlu0 %140
    %v144 = vadd.f32 %v110, %v139
    %v145 = vadd.f32 %v111, %v141
    %s146 = sld [smem:[#allocation7 + $0x37]]
    %v147 = vstv %s146
    %v148 = vmul.f32 %v147, %v91
    %v149 = vmul.f32 %v147, %v92
    %152 = vrot.lane.b32.xlu0 %v148, 127
    %v153 = vpop.permute.xlu0 %152
    %154 = vrot.lane.b32.xlu0 %v149, 127
    %v155 = vpop.permute.xlu0 %154
    %v158 = vadd.f32 %v116, %v153
    %v159 = vadd.f32 %v117, %v155
    %s160 = sld [smem:[#allocation7 + $0x2]]
    %v161 = vstv %s160
    %v162 = vmul.f32 %v161, %v91
    %v163 = vmul.f32 %v161, %v92
    %166 = vrot.lane.b32.xlu0 %v162, 126
    %v167 = vpop.permute.xlu0 %166
    %168 = vrot.lane.b32.xlu0 %v163, 126
    %v169 = vpop.permute.xlu0 %168
    %v172 = vadd.f32 %v130, %v167
    %v173 = vadd.f32 %v131, %v169
    %s174 = sld [smem:[#allocation7 + $0x1d]]
    %v175 = vstv %s174
    %v176 = vmul.f32 %v175, %v91
    %v177 = vmul.f32 %v175, %v92
    %180 = vrot.lane.b32.xlu0 %v176, 126
    %v181 = vpop.permute.xlu0 %180
    %182 = vrot.lane.b32.xlu0 %v177, 126
    %v183 = vpop.permute.xlu0 %182
    %v186 = vadd.f32 %v144, %v181
    %v187 = vadd.f32 %v145, %v183
    %s188 = sld [smem:[#allocation7 + $0x38]]
    %v189 = vstv %s188
    %v190 = vmul.f32 %v189, %v91
    %v191 = vmul.f32 %v189, %v92
    %194 = vrot.lane.b32.xlu0 %v190, 126
    %v195 = vpop.permute.xlu0 %194
    %196 = vrot.lane.b32.xlu0 %v191, 126
    %v197 = vpop.permute.xlu0 %196
    %v200 = vadd.f32 %v158, %v195
    %v201 = vadd.f32 %v159, %v197
    %s202 = sld [smem:[#allocation7 + $0x3]]
    %v203 = vstv %s202
    %v204 = vmul.f32 %v203, %v91
    %v205 = vmul.f32 %v203, %v92
    %v206 = vmul.f32 %v203, %v93
    %vm210 = vcmask 1046528
    %v211 = vrot.slane %v204, 1
    %v212 = vrot.slane %v205, 1
    %v213 = vsel %vm210, %v211, %v212
    %v214 = vrot.slane %v206, 1
    %v215 = vsel %vm210, %v212, %v214
    %v218 = vadd.f32 %v172, %v213
    %v219 = vadd.f32 %v173, %v215
    %s220 = sld [smem:[#allocation7 + $0x1e]]
    %v221 = vstv %s220
    %v222 = vmul.f32 %v221, %v91
    %v223 = vmul.f32 %v221, %v92
    %v224 = vmul.f32 %v221, %v93
    %v228 = vrot.slane %v222, 1
    %v229 = vrot.slane %v223, 1
    %v230 = vsel %vm210, %v228, %v229
    %v231 = vrot.slane %v224, 1
    %v232 = vsel %vm210, %v229, %v231
    %v235 = vadd.f32 %v186, %v230
    %v236 = vadd.f32 %v187, %v232
    %s237 = sld [smem:[#allocation7 + $0x39]]
    %v238 = vstv %s237
    %v239 = vmul.f32 %v238, %v91
    %v240 = vmul.f32 %v238, %v92
    %v241 = vmul.f32 %v238, %v93
    %v245 = vrot.slane %v239, 1
    %v246 = vrot.slane %v240, 1
    %v247 = vsel %vm210, %v245, %v246
    %v248 = vrot.slane %v241, 1
    %v249 = vsel %vm210, %v246, %v248
    %v252 = vadd.f32 %v200, %v247
    %v253 = vadd.f32 %v201, %v249
    %s254 = sld [smem:[#allocation7 + $0x4]]
    %v255 = vstv %s254
    %v256 = vmul.f32 %v255, %v91
    %v257 = vmul.f32 %v255, %v92
    %v258 = vmul.f32 %v255, %v93
    %v262 = vrot.slane %v256, 1
    %v263 = vrot.slane %v257, 1
    %v264 = vsel %vm210, %v262, %v263
    %v265 = vrot.slane %v258, 1
    %v266 = vsel %vm210, %v263, %v265
    %267 = vrot.lane.b32.xlu0 %v264, 127
    %v268 = vpop.permute.xlu0 %267
    %269 = vrot.lane.b32.xlu0 %v266, 127
    %v270 = vpop.permute.xlu0 %269
    %v273 = vadd.f32 %v218, %v268
    %v274 = vadd.f32 %v219, %v270
    %s275 = sld [smem:[#allocation7 + $0x1f]]
    %v276 = vstv %s275
    %v277 = vmul.f32 %v276, %v91
    %v278 = vmul.f32 %v276, %v92
    %v279 = vmul.f32 %v276, %v93
    %v283 = vrot.slane %v277, 1
    %v284 = vrot.slane %v278, 1
    %v285 = vsel %vm210, %v283, %v284
    %v286 = vrot.slane %v279, 1
    %v287 = vsel %vm210, %v284, %v286
    %288 = vrot.lane.b32.xlu0 %v285, 127
    %v289 = vpop.permute.xlu0 %288
    %290 = vrot.lane.b32.xlu0 %v287, 127
    %v291 = vpop.permute.xlu0 %290
    %v294 = vadd.f32 %v235, %v289
    %v295 = vadd.f32 %v236, %v291
    %s296 = sld [smem:[#allocation7 + $0x3a]]
    %v297 = vstv %s296
    %v298 = vmul.f32 %v297, %v91
    %v299 = vmul.f32 %v297, %v92
    %v300 = vmul.f32 %v297, %v93
    %v304 = vrot.slane %v298, 1
    %v305 = vrot.slane %v299, 1
    %v306 = vsel %vm210, %v304, %v305
    %v307 = vrot.slane %v300, 1
    %v308 = vsel %vm210, %v305, %v307
    %309 = vrot.lane.b32.xlu0 %v306, 127
    %v310 = vpop.permute.xlu0 %309
    %311 = vrot.lane.b32.xlu0 %v308, 127
    %v312 = vpop.permute.xlu0 %311
    %v315 = vadd.f32 %v252, %v310
    %v316 = vadd.f32 %v253, %v312
    %s317 = sld [smem:[#allocation7 + $0x5]]
    %v318 = vstv %s317
    %v319 = vmul.f32 %v318, %v91
    %v320 = vmul.f32 %v318, %v92
    %v321 = vmul.f32 %v318, %v93
    %v325 = vrot.slane %v319, 1
    %v326 = vrot.slane %v320, 1
    %v327 = vsel %vm210, %v325, %v326
    %v328 = vrot.slane %v321, 1
    %v329 = vsel %vm210, %v326, %v328
    %330 = vrot.lane.b32.xlu0 %v327, 126
    %v331 = vpop.permute.xlu0 %330
    %332 = vrot.lane.b32.xlu0 %v329, 126
    %v333 = vpop.permute.xlu0 %332
    %v336 = vadd.f32 %v273, %v331
    %v337 = vadd.f32 %v274, %v333
    %s338 = sld [smem:[#allocation7 + $0x20]]
    %v339 = vstv %s338
    %v340 = vmul.f32 %v339, %v91
    %v341 = vmul.f32 %v339, %v92
    %v342 = vmul.f32 %v339, %v93
    %v346 = vrot.slane %v340, 1
    %v347 = vrot.slane %v341, 1
    %v348 = vsel %vm210, %v346, %v347
    %v349 = vrot.slane %v342, 1
    %v350 = vsel %vm210, %v347, %v349
    %351 = vrot.lane.b32.xlu0 %v348, 126
    %v352 = vpop.permute.xlu0 %351
    %353 = vrot.lane.b32.xlu0 %v350, 126
    %v354 = vpop.permute.xlu0 %353
    %v357 = vadd.f32 %v294, %v352
    %v358 = vadd.f32 %v295, %v354
    %s359 = sld [smem:[#allocation7 + $0x3b]]
    %v360 = vstv %s359
    %v361 = vmul.f32 %v360, %v91
    %v362 = vmul.f32 %v360, %v92
    %v363 = vmul.f32 %v360, %v93
    %v367 = vrot.slane %v361, 1
    %v368 = vrot.slane %v362, 1
    %v369 = vsel %vm210, %v367, %v368
    %v370 = vrot.slane %v363, 1
    %v371 = vsel %vm210, %v368, %v370
    %372 = vrot.lane.b32.xlu0 %v369, 126
    %v373 = vpop.permute.xlu0 %372
    %374 = vrot.lane.b32.xlu0 %v371, 126
    %v375 = vpop.permute.xlu0 %374
    %v378 = vadd.f32 %v315, %v373
    %v379 = vadd.f32 %v316, %v375
    %s380 = sld [smem:[#allocation7 + $0x6]]
    %v381 = vstv %s380
    %v382 = vmul.f32 %v381, %v91
    %v383 = vmul.f32 %v381, %v92
    %v384 = vmul.f32 %v381, %v93
    %vm388 = vcmask 1045504
    %v389 = vrot.slane %v382, 2
    %v390 = vrot.slane %v383, 2
    %v391 = vsel %vm388, %v389, %v390
    %v392 = vrot.slane %v384, 2
    %v393 = vsel %vm388, %v390, %v392
    %v396 = vadd.f32 %v336, %v391
    %v397 = vadd.f32 %v337, %v393
    %s398 = sld [smem:[#allocation7 + $0x21]]
    %v399 = vstv %s398
    %v400 = vmul.f32 %v399, %v91
    %v401 = vmul.f32 %v399, %v92
    %v402 = vmul.f32 %v399, %v93
    %v406 = vrot.slane %v400, 2
    %v407 = vrot.slane %v401, 2
    %v408 = vsel %vm388, %v406, %v407
    %v409 = vrot.slane %v402, 2
    %v410 = vsel %vm388, %v407, %v409
    %v413 = vadd.f32 %v357, %v408
    %v414 = vadd.f32 %v358, %v410
    %s415 = sld [smem:[#allocation7 + $0x3c]]
    %v416 = vstv %s415
    %v417 = vmul.f32 %v416, %v91
    %v418 = vmul.f32 %v416, %v92
    %v419 = vmul.f32 %v416, %v93
    %v423 = vrot.slane %v417, 2
    %v424 = vrot.slane %v418, 2
    %v425 = vsel %vm388, %v423, %v424
    %v426 = vrot.slane %v419, 2
    %v427 = vsel %vm388, %v424, %v426
    %v430 = vadd.f32 %v378, %v425
    %v431 = vadd.f32 %v379, %v427
    %s432 = sld [smem:[#allocation7 + $0x7]]
    %v433 = vstv %s432
    %v434 = vmul.f32 %v433, %v91
    %v435 = vmul.f32 %v433, %v92
    %v436 = vmul.f32 %v433, %v93
    %v440 = vrot.slane %v434, 2
    %v441 = vrot.slane %v435, 2
    %v442 = vsel %vm388, %v440, %v441
    %v443 = vrot.slane %v436, 2
    %v444 = vsel %vm388, %v441, %v443
    %445 = vrot.lane.b32.xlu0 %v442, 127
    %v446 = vpop.permute.xlu0 %445
    %447 = vrot.lane.b32.xlu0 %v444, 127
    %v448 = vpop.permute.xlu0 %447
    %v451 = vadd.f32 %v396, %v446
    %v452 = vadd.f32 %v397, %v448
    %s453 = sld [smem:[#allocation7 + $0x22]]
    %v454 = vstv %s453
    %v455 = vmul.f32 %v454, %v91
    %v456 = vmul.f32 %v454, %v92
    %v457 = vmul.f32 %v454, %v93
    %v461 = vrot.slane %v455, 2
    %v462 = vrot.slane %v456, 2
    %v463 = vsel %vm388, %v461, %v462
    %v464 = vrot.slane %v457, 2
    %v465 = vsel %vm388, %v462, %v464
    %466 = vrot.lane.b32.xlu0 %v463, 127
    %v467 = vpop.permute.xlu0 %466
    %468 = vrot.lane.b32.xlu0 %v465, 127
    %v469 = vpop.permute.xlu0 %468
    %v472 = vadd.f32 %v413, %v467
    %v473 = vadd.f32 %v414, %v469
    %s474 = sld [smem:[#allocation7 + $0x3d]]
    %v475 = vstv %s474
    %v476 = vmul.f32 %v475, %v91
    %v477 = vmul.f32 %v475, %v92
    %v478 = vmul.f32 %v475, %v93
    %v482 = vrot.slane %v476, 2
    %v483 = vrot.slane %v477, 2
    %v484 = vsel %vm388, %v482, %v483
    %v485 = vrot.slane %v478, 2
    %v486 = vsel %vm388, %v483, %v485
    %487 = vrot.lane.b32.xlu0 %v484, 127
    %v488 = vpop.permute.xlu0 %487
    %489 = vrot.lane.b32.xlu0 %v486, 127
    %v490 = vpop.permute.xlu0 %489
    %v493 = vadd.f32 %v430, %v488
    %v494 = vadd.f32 %v431, %v490
    %s495 = sld [smem:[#allocation7 + $0x8]]
    %v496 = vstv %s495
    %v497 = vmul.f32 %v496, %v91
    %v498 = vmul.f32 %v496, %v92
    %v499 = vmul.f32 %v496, %v93
    %v503 = vrot.slane %v497, 2
    %v504 = vrot.slane %v498, 2
    %v505 = vsel %vm388, %v503, %v504
    %v506 = vrot.slane %v499, 2
    %v507 = vsel %vm388, %v504, %v506
    %508 = vrot.lane.b32.xlu0 %v505, 126
    %v509 = vpop.permute.xlu0 %508
    %510 = vrot.lane.b32.xlu0 %v507, 126
    %v511 = vpop.permute.xlu0 %510
    %v514 = vadd.f32 %v451, %v509
    %v515 = vadd.f32 %v452, %v511
    %s516 = sld [smem:[#allocation7 + $0x23]]
    %v517 = vstv %s516
    %v518 = vmul.f32 %v517, %v91
    %v519 = vmul.f32 %v517, %v92
    %v520 = vmul.f32 %v517, %v93
    %v524 = vrot.slane %v518, 2
    %v525 = vrot.slane %v519, 2
    %v526 = vsel %vm388, %v524, %v525
    %v527 = vrot.slane %v520, 2
    %v528 = vsel %vm388, %v525, %v527
    %529 = vrot.lane.b32.xlu0 %v526, 126
    %v530 = vpop.permute.xlu0 %529
    %531 = vrot.lane.b32.xlu0 %v528, 126
    %v532 = vpop.permute.xlu0 %531
    %v535 = vadd.f32 %v472, %v530
    %v536 = vadd.f32 %v473, %v532
    %s537 = sld [smem:[#allocation7 + $0x3e]]
    %v538 = vstv %s537
    %v539 = vmul.f32 %v538, %v91
    %v540 = vmul.f32 %v538, %v92
    %v541 = vmul.f32 %v538, %v93
    %v545 = vrot.slane %v539, 2
    %v546 = vrot.slane %v540, 2
    %v547 = vsel %vm388, %v545, %v546
    %v548 = vrot.slane %v541, 2
    %v549 = vsel %vm388, %v546, %v548
    %550 = vrot.lane.b32.xlu0 %v547, 126
    %v551 = vpop.permute.xlu0 %550
    %552 = vrot.lane.b32.xlu0 %v549, 126
    %v553 = vpop.permute.xlu0 %552
    %v556 = vadd.f32 %v493, %v551
    %v557 = vadd.f32 %v494, %v553
    %s558 = sld [smem:[#allocation7 + $0x9]]
    %v559 = vstv %s558
    %v560 = vmul.f32 %v559, %v94
    %v561 = vmul.f32 %v559, %v95
    %v562 = vadd.f32 %v514, %v560
    %v563 = vadd.f32 %v515, %v561
    %s564 = sld [smem:[#allocation7 + $0x24]]
    %v565 = vstv %s564
    %v566 = vmul.f32 %v565, %v94
    %v567 = vmul.f32 %v565, %v95
    %v568 = vadd.f32 %v535, %v566
    %v569 = vadd.f32 %v536, %v567
    %s570 = sld [smem:[#allocation7 + $0x3f]]
    %v571 = vstv %s570
    %v572 = vmul.f32 %v571, %v94
    %v573 = vmul.f32 %v571, %v95
    %v574 = vadd.f32 %v556, %v572
    %v575 = vadd.f32 %v557, %v573
    %s576 = sld [smem:[#allocation7 + $0xa]]
    %v577 = vstv %s576
    %v578 = vmul.f32 %v577, %v94
    %v579 = vmul.f32 %v577, %v95
    %582 = vrot.lane.b32.xlu0 %v578, 127
    %v583 = vpop.permute.xlu0 %582
    %584 = vrot.lane.b32.xlu0 %v579, 127
    %v585 = vpop.permute.xlu0 %584
    %v588 = vadd.f32 %v562, %v583
    %v589 = vadd.f32 %v563, %v585
    %s590 = sld [smem:[#allocation7 + $0x25]]
    %v591 = vstv %s590
    %v592 = vmul.f32 %v591, %v94
    %v593 = vmul.f32 %v591, %v95
    %596 = vrot.lane.b32.xlu0 %v592, 127
    %v597 = vpop.permute.xlu0 %596
    %598 = vrot.lane.b32.xlu0 %v593, 127
    %v599 = vpop.permute.xlu0 %598
    %v602 = vadd.f32 %v568, %v597
    %v603 = vadd.f32 %v569, %v599
    %s604 = sld [smem:[#allocation7 + $0x40]]
    %v605 = vstv %s604
    %v606 = vmul.f32 %v605, %v94
    %v607 = vmul.f32 %v605, %v95
    %610 = vrot.lane.b32.xlu0 %v606, 127
    %v611 = vpop.permute.xlu0 %610
    %612 = vrot.lane.b32.xlu0 %v607, 127
    %v613 = vpop.permute.xlu0 %612
    %v616 = vadd.f32 %v574, %v611
    %v617 = vadd.f32 %v575, %v613
    %s618 = sld [smem:[#allocation7 + $0xb]]
    %v619 = vstv %s618
    %v620 = vmul.f32 %v619, %v94
    %v621 = vmul.f32 %v619, %v95
    %624 = vrot.lane.b32.xlu0 %v620, 126
    %v625 = vpop.permute.xlu0 %624
    %626 = vrot.lane.b32.xlu0 %v621, 126
    %v627 = vpop.permute.xlu0 %626
    %v630 = vadd.f32 %v588, %v625
    %v631 = vadd.f32 %v589, %v627
    %s632 = sld [smem:[#allocation7 + $0x26]]
    %v633 = vstv %s632
    %v634 = vmul.f32 %v633, %v94
    %v635 = vmul.f32 %v633, %v95
    %638 = vrot.lane.b32.xlu0 %v634, 126
    %v639 = vpop.permute.xlu0 %638
    %640 = vrot.lane.b32.xlu0 %v635, 126
    %v641 = vpop.permute.xlu0 %640
    %v644 = vadd.f32 %v602, %v639
    %v645 = vadd.f32 %v603, %v641
    %s646 = sld [smem:[#allocation7 + $0x41]]
    %v647 = vstv %s646
    %v648 = vmul.f32 %v647, %v94
    %v649 = vmul.f32 %v647, %v95
    %652 = vrot.lane.b32.xlu0 %v648, 126
    %v653 = vpop.permute.xlu0 %652
    %654 = vrot.lane.b32.xlu0 %v649, 126
    %v655 = vpop.permute.xlu0 %654
    %v658 = vadd.f32 %v616, %v653
    %v659 = vadd.f32 %v617, %v655
    %s660 = sld [smem:[#allocation7 + $0xc]]
    %v661 = vstv %s660
    %v662 = vmul.f32 %v661, %v94
    %v663 = vmul.f32 %v661, %v95
    %v664 = vmul.f32 %v661, %v96
    %v668 = vrot.slane %v662, 1
    %v669 = vrot.slane %v663, 1
    %v670 = vsel %vm210, %v668, %v669
    %v671 = vrot.slane %v664, 1
    %v672 = vsel %vm210, %v669, %v671
    %v675 = vadd.f32 %v630, %v670
    %v676 = vadd.f32 %v631, %v672
    %s677 = sld [smem:[#allocation7 + $0x27]]
    %v678 = vstv %s677
    %v679 = vmul.f32 %v678, %v94
    %v680 = vmul.f32 %v678, %v95
    %v681 = vmul.f32 %v678, %v96
    %v685 = vrot.slane %v679, 1
    %v686 = vrot.slane %v680, 1
    %v687 = vsel %vm210, %v685, %v686
    %v688 = vrot.slane %v681, 1
    %v689 = vsel %vm210, %v686, %v688
    %v692 = vadd.f32 %v644, %v687
    %v693 = vadd.f32 %v645, %v689
    %s694 = sld [smem:[#allocation7 + $0x42]]
    %v695 = vstv %s694
    %v696 = vmul.f32 %v695, %v94
    %v697 = vmul.f32 %v695, %v95
    %v698 = vmul.f32 %v695, %v96
    %v702 = vrot.slane %v696, 1
    %v703 = vrot.slane %v697, 1
    %v704 = vsel %vm210, %v702, %v703
    %v705 = vrot.slane %v698, 1
    %v706 = vsel %vm210, %v703, %v705
    %v709 = vadd.f32 %v658, %v704
    %v710 = vadd.f32 %v659, %v706
    %s711 = sld [smem:[#allocation7 + $0xd]]
    %v712 = vstv %s711
    %v713 = vmul.f32 %v712, %v94
    %v714 = vmul.f32 %v712, %v95
    %v715 = vmul.f32 %v712, %v96
    %v719 = vrot.slane %v713, 1
    %v720 = vrot.slane %v714, 1
    %v721 = vsel %vm210, %v719, %v720
    %v722 = vrot.slane %v715, 1
    %v723 = vsel %vm210, %v720, %v722
    %724 = vrot.lane.b32.xlu0 %v721, 127
    %v725 = vpop.permute.xlu0 %724
    %726 = vrot.lane.b32.xlu0 %v723, 127
    %v727 = vpop.permute.xlu0 %726
    %v730 = vadd.f32 %v675, %v725
    %v731 = vadd.f32 %v676, %v727
    %s732 = sld [smem:[#allocation7 + $0x28]]
    %v733 = vstv %s732
    %v734 = vmul.f32 %v733, %v94
    %v735 = vmul.f32 %v733, %v95
    %v736 = vmul.f32 %v733, %v96
    %v740 = vrot.slane %v734, 1
    %v741 = vrot.slane %v735, 1
    %v742 = vsel %vm210, %v740, %v741
    %v743 = vrot.slane %v736, 1
    %v744 = vsel %vm210, %v741, %v743
    %745 = vrot.lane.b32.xlu0 %v742, 127
    %v746 = vpop.permute.xlu0 %745
    %747 = vrot.lane.b32.xlu0 %v744, 127
    %v748 = vpop.permute.xlu0 %747
    %v751 = vadd.f32 %v692, %v746
    %v752 = vadd.f32 %v693, %v748
    %s753 = sld [smem:[#allocation7 + $0x43]]
    %v754 = vstv %s753
    %v755 = vmul.f32 %v754, %v94
    %v756 = vmul.f32 %v754, %v95
    %v757 = vmul.f32 %v754, %v96
    %v761 = vrot.slane %v755, 1
    %v762 = vrot.slane %v756, 1
    %v763 = vsel %vm210, %v761, %v762
    %v764 = vrot.slane %v757, 1
    %v765 = vsel %vm210, %v762, %v764
    %766 = vrot.lane.b32.xlu0 %v763, 127
    %v767 = vpop.permute.xlu0 %766
    %768 = vrot.lane.b32.xlu0 %v765, 127
    %v769 = vpop.permute.xlu0 %768
    %v772 = vadd.f32 %v709, %v767
    %v773 = vadd.f32 %v710, %v769
    %s774 = sld [smem:[#allocation7 + $0xe]]
    %v775 = vstv %s774
    %v776 = vmul.f32 %v775, %v94
    %v777 = vmul.f32 %v775, %v95
    %v778 = vmul.f32 %v775, %v96
    %v782 = vrot.slane %v776, 1
    %v783 = vrot.slane %v777, 1
    %v784 = vsel %vm210, %v782, %v783
    %v785 = vrot.slane %v778, 1
    %v786 = vsel %vm210, %v783, %v785
    %787 = vrot.lane.b32.xlu0 %v784, 126
    %v788 = vpop.permute.xlu0 %787
    %789 = vrot.lane.b32.xlu0 %v786, 126
    %v790 = vpop.permute.xlu0 %789
    %v793 = vadd.f32 %v730, %v788
    %v794 = vadd.f32 %v731, %v790
    %s795 = sld [smem:[#allocation7 + $0x29]]
    %v796 = vstv %s795
    %v797 = vmul.f32 %v796, %v94
    %v798 = vmul.f32 %v796, %v95
    %v799 = vmul.f32 %v796, %v96
    %v803 = vrot.slane %v797, 1
    %v804 = vrot.slane %v798, 1
    %v805 = vsel %vm210, %v803, %v804
    %v806 = vrot.slane %v799, 1
    %v807 = vsel %vm210, %v804, %v806
    %808 = vrot.lane.b32.xlu0 %v805, 126
    %v809 = vpop.permute.xlu0 %808
    %810 = vrot.lane.b32.xlu0 %v807, 126
    %v811 = vpop.permute.xlu0 %810
    %v814 = vadd.f32 %v751, %v809
    %v815 = vadd.f32 %v752, %v811
    %s816 = sld [smem:[#allocation7 + $0x44]]
    %v817 = vstv %s816
    %v818 = vmul.f32 %v817, %v94
    %v819 = vmul.f32 %v817, %v95
    %v820 = vmul.f32 %v817, %v96
    %v824 = vrot.slane %v818, 1
    %v825 = vrot.slane %v819, 1
    %v826 = vsel %vm210, %v824, %v825
    %v827 = vrot.slane %v820, 1
    %v828 = vsel %vm210, %v825, %v827
    %829 = vrot.lane.b32.xlu0 %v826, 126
    %v830 = vpop.permute.xlu0 %829
    %831 = vrot.lane.b32.xlu0 %v828, 126
    %v832 = vpop.permute.xlu0 %831
    %v835 = vadd.f32 %v772, %v830
    %v836 = vadd.f32 %v773, %v832
    %s837 = sld [smem:[#allocation7 + $0xf]]
    %v838 = vstv %s837
    %v839 = vmul.f32 %v838, %v94
    %v840 = vmul.f32 %v838, %v95
    %v841 = vmul.f32 %v838, %v96
    %v845 = vrot.slane %v839, 2
    %v846 = vrot.slane %v840, 2
    %v847 = vsel %vm388, %v845, %v846
    %v848 = vrot.slane %v841, 2
    %v849 = vsel %vm388, %v846, %v848
    %v852 = vadd.f32 %v793, %v847
    %v853 = vadd.f32 %v794, %v849
    %s854 = sld [smem:[#allocation7 + $0x2a]]
    %v855 = vstv %s854
    %v856 = vmul.f32 %v855, %v94
    %v857 = vmul.f32 %v855, %v95
    %v858 = vmul.f32 %v855, %v96
    %v862 = vrot.slane %v856, 2
    %v863 = vrot.slane %v857, 2
    %v864 = vsel %vm388, %v862, %v863
    %v865 = vrot.slane %v858, 2
    %v866 = vsel %vm388, %v863, %v865
    %v869 = vadd.f32 %v814, %v864
    %v870 = vadd.f32 %v815, %v866
    %s871 = sld [smem:[#allocation7 + $0x45]]
    %v872 = vstv %s871
    %v873 = vmul.f32 %v872, %v94
    %v874 = vmul.f32 %v872, %v95
    %v875 = vmul.f32 %v872, %v96
    %v879 = vrot.slane %v873, 2
    %v880 = vrot.slane %v874, 2
    %v881 = vsel %vm388, %v879, %v880
    %v882 = vrot.slane %v875, 2
    %v883 = vsel %vm388, %v880, %v882
    %v886 = vadd.f32 %v835, %v881
    %v887 = vadd.f32 %v836, %v883
    %s888 = sld [smem:[#allocation7 + $0x10]]
    %v889 = vstv %s888
    %v890 = vmul.f32 %v889, %v94
    %v891 = vmul.f32 %v889, %v95
    %v892 = vmul.f32 %v889, %v96
    %v896 = vrot.slane %v890, 2
    %v897 = vrot.slane %v891, 2
    %v898 = vsel %vm388, %v896, %v897
    %v899 = vrot.slane %v892, 2
    %v900 = vsel %vm388, %v897, %v899
    %901 = vrot.lane.b32.xlu0 %v898, 127
    %v902 = vpop.permute.xlu0 %901
    %903 = vrot.lane.b32.xlu0 %v900, 127
    %v904 = vpop.permute.xlu0 %903
    %v907 = vadd.f32 %v852, %v902
    %v908 = vadd.f32 %v853, %v904
    %s909 = sld [smem:[#allocation7 + $0x2b]]
    %v910 = vstv %s909
    %v911 = vmul.f32 %v910, %v94
    %v912 = vmul.f32 %v910, %v95
    %v913 = vmul.f32 %v910, %v96
    %v917 = vrot.slane %v911, 2
    %v918 = vrot.slane %v912, 2
    %v919 = vsel %vm388, %v917, %v918
    %v920 = vrot.slane %v913, 2
    %v921 = vsel %vm388, %v918, %v920
    %922 = vrot.lane.b32.xlu0 %v919, 127
    %v923 = vpop.permute.xlu0 %922
    %924 = vrot.lane.b32.xlu0 %v921, 127
    %v925 = vpop.permute.xlu0 %924
    %v928 = vadd.f32 %v869, %v923
    %v929 = vadd.f32 %v870, %v925
    %s930 = sld [smem:[#allocation7 + $0x46]]
    %v931 = vstv %s930
    %v932 = vmul.f32 %v931, %v94
    %v933 = vmul.f32 %v931, %v95
    %v934 = vmul.f32 %v931, %v96
    %v938 = vrot.slane %v932, 2
    %v939 = vrot.slane %v933, 2
    %v940 = vsel %vm388, %v938, %v939
    %v941 = vrot.slane %v934, 2
    %v942 = vsel %vm388, %v939, %v941
    %943 = vrot.lane.b32.xlu0 %v940, 127
    %v944 = vpop.permute.xlu0 %943
    %945 = vrot.lane.b32.xlu0 %v942, 127
    %v946 = vpop.permute.xlu0 %945
    %v949 = vadd.f32 %v886, %v944
    %v950 = vadd.f32 %v887, %v946
    %s951 = sld [smem:[#allocation7 + $0x11]]
    %v952 = vstv %s951
    %v953 = vmul.f32 %v952, %v94
    %v954 = vmul.f32 %v952, %v95
    %v955 = vmul.f32 %v952, %v96
    %v959 = vrot.slane %v953, 2
    %v960 = vrot.slane %v954, 2
    %v961 = vsel %vm388, %v959, %v960
    %v962 = vrot.slane %v955, 2
    %v963 = vsel %vm388, %v960, %v962
    %964 = vrot.lane.b32.xlu0 %v961, 126
    %v965 = vpop.permute.xlu0 %964
    %966 = vrot.lane.b32.xlu0 %v963, 126
    %v967 = vpop.permute.xlu0 %966
    %v970 = vadd.f32 %v907, %v965
    %v971 = vadd.f32 %v908, %v967
    %s972 = sld [smem:[#allocation7 + $0x2c]]
    %v973 = vstv %s972
    %v974 = vmul.f32 %v973, %v94
    %v975 = vmul.f32 %v973, %v95
    %v976 = vmul.f32 %v973, %v96
    %v980 = vrot.slane %v974, 2
    %v981 = vrot.slane %v975, 2
    %v982 = vsel %vm388, %v980, %v981
    %v983 = vrot.slane %v976, 2
    %v984 = vsel %vm388, %v981, %v983
    %985 = vrot.lane.b32.xlu0 %v982, 126
    %v986 = vpop.permute.xlu0 %985
    %987 = vrot.lane.b32.xlu0 %v984, 126
    %v988 = vpop.permute.xlu0 %987
    %v991 = vadd.f32 %v928, %v986
    %v992 = vadd.f32 %v929, %v988
    %s993 = sld [smem:[#allocation7 + $0x47]]
    %v994 = vstv %s993
    %v995 = vmul.f32 %v994, %v94
    %v996 = vmul.f32 %v994, %v95
    %v997 = vmul.f32 %v994, %v96
    %v1001 = vrot.slane %v995, 2
    %v1002 = vrot.slane %v996, 2
    %v1003 = vsel %vm388, %v1001, %v1002
    %v1004 = vrot.slane %v997, 2
    %v1005 = vsel %vm388, %v1002, %v1004
    %1006 = vrot.lane.b32.xlu0 %v1003, 126
    %v1007 = vpop.permute.xlu0 %1006
    %1008 = vrot.lane.b32.xlu0 %v1005, 126
    %v1009 = vpop.permute.xlu0 %1008
    %v1012 = vadd.f32 %v949, %v1007
    %v1013 = vadd.f32 %v950, %v1009
    %s1014 = sld [smem:[#allocation7 + $0x12]]
    %v1015 = vstv %s1014
    %v1016 = vmul.f32 %v1015, %v97
    %v1017 = vmul.f32 %v1015, %v98
    %v1018 = vadd.f32 %v970, %v1016
    %v1019 = vadd.f32 %v971, %v1017
    %s1020 = sld [smem:[#allocation7 + $0x2d]]
    %v1021 = vstv %s1020
    %v1022 = vmul.f32 %v1021, %v97
    %v1023 = vmul.f32 %v1021, %v98
    %v1024 = vadd.f32 %v991, %v1022
    %v1025 = vadd.f32 %v992, %v1023
    %s1026 = sld [smem:[#allocation7 + $0x48]]
    %v1027 = vstv %s1026
    %v1028 = vmul.f32 %v1027, %v97
    %v1029 = vmul.f32 %v1027, %v98
    %v1030 = vadd.f32 %v1012, %v1028
    %v1031 = vadd.f32 %v1013, %v1029
    %s1032 = sld [smem:[#allocation7 + $0x13]]
    %v1033 = vstv %s1032
    %v1034 = vmul.f32 %v1033, %v97
    %v1035 = vmul.f32 %v1033, %v98
    %1038 = vrot.lane.b32.xlu0 %v1034, 127
    %v1039 = vpop.permute.xlu0 %1038
    %1040 = vrot.lane.b32.xlu0 %v1035, 127
    %v1041 = vpop.permute.xlu0 %1040
    %v1044 = vadd.f32 %v1018, %v1039
    %v1045 = vadd.f32 %v1019, %v1041
    %s1046 = sld [smem:[#allocation7 + $0x2e]]
    %v1047 = vstv %s1046
    %v1048 = vmul.f32 %v1047, %v97
    %v1049 = vmul.f32 %v1047, %v98
    %1052 = vrot.lane.b32.xlu0 %v1048, 127
    %v1053 = vpop.permute.xlu0 %1052
    %1054 = vrot.lane.b32.xlu0 %v1049, 127
    %v1055 = vpop.permute.xlu0 %1054
    %v1058 = vadd.f32 %v1024, %v1053
    %v1059 = vadd.f32 %v1025, %v1055
    %s1060 = sld [smem:[#allocation7 + $0x49]]
    %v1061 = vstv %s1060
    %v1062 = vmul.f32 %v1061, %v97
    %v1063 = vmul.f32 %v1061, %v98
    %1066 = vrot.lane.b32.xlu0 %v1062, 127
    %v1067 = vpop.permute.xlu0 %1066
    %1068 = vrot.lane.b32.xlu0 %v1063, 127
    %v1069 = vpop.permute.xlu0 %1068
    %v1072 = vadd.f32 %v1030, %v1067
    %v1073 = vadd.f32 %v1031, %v1069
    %s1074 = sld [smem:[#allocation7 + $0x14]]
    %v1075 = vstv %s1074
    %v1076 = vmul.f32 %v1075, %v97
    %v1077 = vmul.f32 %v1075, %v98
    %1080 = vrot.lane.b32.xlu0 %v1076, 126
    %v1081 = vpop.permute.xlu0 %1080
    %1082 = vrot.lane.b32.xlu0 %v1077, 126
    %v1083 = vpop.permute.xlu0 %1082
    %v1086 = vadd.f32 %v1044, %v1081
    %v1087 = vadd.f32 %v1045, %v1083
    %s1088 = sld [smem:[#allocation7 + $0x2f]]
    %v1089 = vstv %s1088
    %v1090 = vmul.f32 %v1089, %v97
    %v1091 = vmul.f32 %v1089, %v98
    %1094 = vrot.lane.b32.xlu0 %v1090, 126
    %v1095 = vpop.permute.xlu0 %1094
    %1096 = vrot.lane.b32.xlu0 %v1091, 126
    %v1097 = vpop.permute.xlu0 %1096
    %v1100 = vadd.f32 %v1058, %v1095
    %v1101 = vadd.f32 %v1059, %v1097
    %s1102 = sld [smem:[#allocation7 + $0x4a]]
    %v1103 = vstv %s1102
    %v1104 = vmul.f32 %v1103, %v97
    %v1105 = vmul.f32 %v1103, %v98
    %1108 = vrot.lane.b32.xlu0 %v1104, 126
    %v1109 = vpop.permute.xlu0 %1108
    %1110 = vrot.lane.b32.xlu0 %v1105, 126
    %v1111 = vpop.permute.xlu0 %1110
    %v1114 = vadd.f32 %v1072, %v1109
    %v1115 = vadd.f32 %v1073, %v1111
    %s1116 = sld [smem:[#allocation7 + $0x15]]
    %v1117 = vstv %s1116
    %v1118 = vmul.f32 %v1117, %v97
    %v1119 = vmul.f32 %v1117, %v98
    %v1120 = vmul.f32 %v1117, %v99
    %v1124 = vrot.slane %v1118, 1
    %v1125 = vrot.slane %v1119, 1
    %v1126 = vsel %vm210, %v1124, %v1125
    %v1127 = vrot.slane %v1120, 1
    %v1128 = vsel %vm210, %v1125, %v1127
    %v1131 = vadd.f32 %v1086, %v1126
    %v1132 = vadd.f32 %v1087, %v1128
    %s1133 = sld [smem:[#allocation7 + $0x30]]
    %v1134 = vstv %s1133
    %v1135 = vmul.f32 %v1134, %v97
    %v1136 = vmul.f32 %v1134, %v98
    %v1137 = vmul.f32 %v1134, %v99
    %v1141 = vrot.slane %v1135, 1
    %v1142 = vrot.slane %v1136, 1
    %v1143 = vsel %vm210, %v1141, %v1142
    %v1144 = vrot.slane %v1137, 1
    %v1145 = vsel %vm210, %v1142, %v1144
    %v1148 = vadd.f32 %v1100, %v1143
    %v1149 = vadd.f32 %v1101, %v1145
    %s1150 = sld [smem:[#allocation7 + $0x4b]]
    %v1151 = vstv %s1150
    %v1152 = vmul.f32 %v1151, %v97
    %v1153 = vmul.f32 %v1151, %v98
    %v1154 = vmul.f32 %v1151, %v99
    %v1158 = vrot.slane %v1152, 1
    %v1159 = vrot.slane %v1153, 1
    %v1160 = vsel %vm210, %v1158, %v1159
    %v1161 = vrot.slane %v1154, 1
    %v1162 = vsel %vm210, %v1159, %v1161
    %v1165 = vadd.f32 %v1114, %v1160
    %v1166 = vadd.f32 %v1115, %v1162
    %s1167 = sld [smem:[#allocation7 + $0x16]]
    %v1168 = vstv %s1167
    %v1169 = vmul.f32 %v1168, %v97
    %v1170 = vmul.f32 %v1168, %v98
    %v1171 = vmul.f32 %v1168, %v99
    %v1175 = vrot.slane %v1169, 1
    %v1176 = vrot.slane %v1170, 1
    %v1177 = vsel %vm210, %v1175, %v1176
    %v1178 = vrot.slane %v1171, 1
    %v1179 = vsel %vm210, %v1176, %v1178
    %1180 = vrot.lane.b32.xlu0 %v1177, 127
    %v1181 = vpop.permute.xlu0 %1180
    %1182 = vrot.lane.b32.xlu0 %v1179, 127
    %v1183 = vpop.permute.xlu0 %1182
    %v1186 = vadd.f32 %v1131, %v1181
    %v1187 = vadd.f32 %v1132, %v1183
    %s1188 = sld [smem:[#allocation7 + $0x31]]
    %v1189 = vstv %s1188
    %v1190 = vmul.f32 %v1189, %v97
    %v1191 = vmul.f32 %v1189, %v98
    %v1192 = vmul.f32 %v1189, %v99
    %v1196 = vrot.slane %v1190, 1
    %v1197 = vrot.slane %v1191, 1
    %v1198 = vsel %vm210, %v1196, %v1197
    %v1199 = vrot.slane %v1192, 1
    %v1200 = vsel %vm210, %v1197, %v1199
    %1201 = vrot.lane.b32.xlu0 %v1198, 127
    %v1202 = vpop.permute.xlu0 %1201
    %1203 = vrot.lane.b32.xlu0 %v1200, 127
    %v1204 = vpop.permute.xlu0 %1203
    %v1207 = vadd.f32 %v1148, %v1202
    %v1208 = vadd.f32 %v1149, %v1204
    %s1209 = sld [smem:[#allocation7 + $0x4c]]
    %v1210 = vstv %s1209
    %v1211 = vmul.f32 %v1210, %v97
    %v1212 = vmul.f32 %v1210, %v98
    %v1213 = vmul.f32 %v1210, %v99
    %v1217 = vrot.slane %v1211, 1
    %v1218 = vrot.slane %v1212, 1
    %v1219 = vsel %vm210, %v1217, %v1218
    %v1220 = vrot.slane %v1213, 1
    %v1221 = vsel %vm210, %v1218, %v1220
    %1222 = vrot.lane.b32.xlu0 %v1219, 127
    %v1223 = vpop.permute.xlu0 %1222
    %1224 = vrot.lane.b32.xlu0 %v1221, 127
    %v1225 = vpop.permute.xlu0 %1224
    %v1228 = vadd.f32 %v1165, %v1223
    %v1229 = vadd.f32 %v1166, %v1225
    %s1230 = sld [smem:[#allocation7 + $0x17]]
    %v1231 = vstv %s1230
    %v1232 = vmul.f32 %v1231, %v97
    %v1233 = vmul.f32 %v1231, %v98
    %v1234 = vmul.f32 %v1231, %v99
    %v1238 = vrot.slane %v1232, 1
    %v1239 = vrot.slane %v1233, 1
    %v1240 = vsel %vm210, %v1238, %v1239
    %v1241 = vrot.slane %v1234, 1
    %v1242 = vsel %vm210, %v1239, %v1241
    %1243 = vrot.lane.b32.xlu0 %v1240, 126
    %v1244 = vpop.permute.xlu0 %1243
    %1245 = vrot.lane.b32.xlu0 %v1242, 126
    %v1246 = vpop.permute.xlu0 %1245
    %v1249 = vadd.f32 %v1186, %v1244
    %v1250 = vadd.f32 %v1187, %v1246
    %s1251 = sld [smem:[#allocation7 + $0x32]]
    %v1252 = vstv %s1251
    %v1253 = vmul.f32 %v1252, %v97
    %v1254 = vmul.f32 %v1252, %v98
    %v1255 = vmul.f32 %v1252, %v99
    %v1259 = vrot.slane %v1253, 1
    %v1260 = vrot.slane %v1254, 1
    %v1261 = vsel %vm210, %v1259, %v1260
    %v1262 = vrot.slane %v1255, 1
    %v1263 = vsel %vm210, %v1260, %v1262
    %1264 = vrot.lane.b32.xlu0 %v1261, 126
    %v1265 = vpop.permute.xlu0 %1264
    %1266 = vrot.lane.b32.xlu0 %v1263, 126
    %v1267 = vpop.permute.xlu0 %1266
    %v1270 = vadd.f32 %v1207, %v1265
    %v1271 = vadd.f32 %v1208, %v1267
    %s1272 = sld [smem:[#allocation7 + $0x4d]]
    %v1273 = vstv %s1272
    %v1274 = vmul.f32 %v1273, %v97
    %v1275 = vmul.f32 %v1273, %v98
    %v1276 = vmul.f32 %v1273, %v99
    %v1280 = vrot.slane %v1274, 1
    %v1281 = vrot.slane %v1275, 1
    %v1282 = vsel %vm210, %v1280, %v1281
    %v1283 = vrot.slane %v1276, 1
    %v1284 = vsel %vm210, %v1281, %v1283
    %1285 = vrot.lane.b32.xlu0 %v1282, 126
    %v1286 = vpop.permute.xlu0 %1285
    %1287 = vrot.lane.b32.xlu0 %v1284, 126
    %v1288 = vpop.permute.xlu0 %1287
    %v1291 = vadd.f32 %v1228, %v1286
    %v1292 = vadd.f32 %v1229, %v1288
    %s1293 = sld [smem:[#allocation7 + $0x18]]
    %v1294 = vstv %s1293
    %v1295 = vmul.f32 %v1294, %v97
    %v1296 = vmul.f32 %v1294, %v98
    %v1297 = vmul.f32 %v1294, %v99
    %v1301 = vrot.slane %v1295, 2
    %v1302 = vrot.slane %v1296, 2
    %v1303 = vsel %vm388, %v1301, %v1302
    %v1304 = vrot.slane %v1297, 2
    %v1305 = vsel %vm388, %v1302, %v1304
    %v1308 = vadd.f32 %v1249, %v1303
    %v1309 = vadd.f32 %v1250, %v1305
    %s1310 = sld [smem:[#allocation7 + $0x33]]
    %v1311 = vstv %s1310
    %v1312 = vmul.f32 %v1311, %v97
    %v1313 = vmul.f32 %v1311, %v98
    %v1314 = vmul.f32 %v1311, %v99
    %v1318 = vrot.slane %v1312, 2
    %v1319 = vrot.slane %v1313, 2
    %v1320 = vsel %vm388, %v1318, %v1319
    %v1321 = vrot.slane %v1314, 2
    %v1322 = vsel %vm388, %v1319, %v1321
    %v1325 = vadd.f32 %v1270, %v1320
    %v1326 = vadd.f32 %v1271, %v1322
    %s1327 = sld [smem:[#allocation7 + $0x4e]]
    %v1328 = vstv %s1327
    %v1329 = vmul.f32 %v1328, %v97
    %v1330 = vmul.f32 %v1328, %v98
    %v1331 = vmul.f32 %v1328, %v99
    %v1335 = vrot.slane %v1329, 2
    %v1336 = vrot.slane %v1330, 2
    %v1337 = vsel %vm388, %v1335, %v1336
    %v1338 = vrot.slane %v1331, 2
    %v1339 = vsel %vm388, %v1336, %v1338
    %v1342 = vadd.f32 %v1291, %v1337
    %v1343 = vadd.f32 %v1292, %v1339
    %s1344 = sld [smem:[#allocation7 + $0x19]]
    %v1345 = vstv %s1344
    %v1346 = vmul.f32 %v1345, %v97
    %v1347 = vmul.f32 %v1345, %v98
    %v1348 = vmul.f32 %v1345, %v99
    %v1352 = vrot.slane %v1346, 2
    %v1353 = vrot.slane %v1347, 2
    %v1354 = vsel %vm388, %v1352, %v1353
    %v1355 = vrot.slane %v1348, 2
    %v1356 = vsel %vm388, %v1353, %v1355
    %1357 = vrot.lane.b32.xlu0 %v1354, 127
    %v1358 = vpop.permute.xlu0 %1357
    %1359 = vrot.lane.b32.xlu0 %v1356, 127
    %v1360 = vpop.permute.xlu0 %1359
    %v1363 = vadd.f32 %v1308, %v1358
    %v1364 = vadd.f32 %v1309, %v1360
    %s1365 = sld [smem:[#allocation7 + $0x34]]
    %v1366 = vstv %s1365
    %v1367 = vmul.f32 %v1366, %v97
    %v1368 = vmul.f32 %v1366, %v98
    %v1369 = vmul.f32 %v1366, %v99
    %v1373 = vrot.slane %v1367, 2
    %v1374 = vrot.slane %v1368, 2
    %v1375 = vsel %vm388, %v1373, %v1374
    %v1376 = vrot.slane %v1369, 2
    %v1377 = vsel %vm388, %v1374, %v1376
    %1378 = vrot.lane.b32.xlu0 %v1375, 127
    %v1379 = vpop.permute.xlu0 %1378
    %1380 = vrot.lane.b32.xlu0 %v1377, 127
    %v1381 = vpop.permute.xlu0 %1380
    %v1384 = vadd.f32 %v1325, %v1379
    %v1385 = vadd.f32 %v1326, %v1381
    %s1386 = sld [smem:[#allocation7 + $0x4f]]
    %v1387 = vstv %s1386
    %v1388 = vmul.f32 %v1387, %v97
    %v1389 = vmul.f32 %v1387, %v98
    %v1390 = vmul.f32 %v1387, %v99
    %v1394 = vrot.slane %v1388, 2
    %v1395 = vrot.slane %v1389, 2
    %v1396 = vsel %vm388, %v1394, %v1395
    %v1397 = vrot.slane %v1390, 2
    %v1398 = vsel %vm388, %v1395, %v1397
    %1399 = vrot.lane.b32.xlu0 %v1396, 127
    %v1400 = vpop.permute.xlu0 %1399
    %1401 = vrot.lane.b32.xlu0 %v1398, 127
    %v1402 = vpop.permute.xlu0 %1401
    %v1405 = vadd.f32 %v1342, %v1400
    %v1406 = vadd.f32 %v1343, %v1402
    %s1407 = sld [smem:[#allocation7 + $0x1a]]
    %v1408 = vstv %s1407
    %v1409 = vmul.f32 %v1408, %v97
    %v1410 = vmul.f32 %v1408, %v98
    %v1411 = vmul.f32 %v1408, %v99
    %v1415 = vrot.slane %v1409, 2
    %v1416 = vrot.slane %v1410, 2
    %v1417 = vsel %vm388, %v1415, %v1416
    %v1418 = vrot.slane %v1411, 2
    %v1419 = vsel %vm388, %v1416, %v1418
    %1420 = vrot.lane.b32.xlu0 %v1417, 126
    %v1421 = vpop.permute.xlu0 %1420
    %1422 = vrot.lane.b32.xlu0 %v1419, 126
    %v1423 = vpop.permute.xlu0 %1422
    %v1426 = vadd.f32 %v1363, %v1421
    %v1427 = vadd.f32 %v1364, %v1423
    %s1428 = sld [smem:[#allocation7 + $0x35]]
    %v1429 = vstv %s1428
    %v1430 = vmul.f32 %v1429, %v97
    %v1431 = vmul.f32 %v1429, %v98
    %v1432 = vmul.f32 %v1429, %v99
    %v1436 = vrot.slane %v1430, 2
    %v1437 = vrot.slane %v1431, 2
    %v1438 = vsel %vm388, %v1436, %v1437
    %v1439 = vrot.slane %v1432, 2
    %v1440 = vsel %vm388, %v1437, %v1439
    %1441 = vrot.lane.b32.xlu0 %v1438, 126
    %v1442 = vpop.permute.xlu0 %1441
    %1443 = vrot.lane.b32.xlu0 %v1440, 126
    %v1444 = vpop.permute.xlu0 %1443
    %v1447 = vadd.f32 %v1384, %v1442
    %v1448 = vadd.f32 %v1385, %v1444
    %s1449 = sld [smem:[#allocation7 + $0x50]]
    %v1450 = vstv %s1449
    %v1451 = vmul.f32 %v1450, %v97
    %v1452 = vmul.f32 %v1450, %v98
    %v1453 = vmul.f32 %v1450, %v99
    %v1457 = vrot.slane %v1451, 2
    %v1458 = vrot.slane %v1452, 2
    %v1459 = vsel %vm388, %v1457, %v1458
    %v1460 = vrot.slane %v1453, 2
    %v1461 = vsel %vm388, %v1458, %v1460
    %1462 = vrot.lane.b32.xlu0 %v1459, 126
    %v1463 = vpop.permute.xlu0 %1462
    %1464 = vrot.lane.b32.xlu0 %v1461, 126
    %v1465 = vpop.permute.xlu0 %1464
    %v1468 = vadd.f32 %v1405, %v1463
    %v1469 = vadd.f32 %v1406, %v1465
    %v1470 = vmax.f32 %v1426, 0.0
    %v1471 = vmax.f32 %v1427, 0.0
    %v1472 = vadd.f32 %v1470, 0.0
    %v1473 = vadd.f32 %v1471, 0.0
    %v1474 = vmax.f32 %v1447, 0.0
    %v1475 = vmax.f32 %v1448, 0.0
    %v1476 = vadd.f32 %v1472, %v1474
    %v1477 = vadd.f32 %v1473, %v1475
    %v1478 = vmax.f32 %v1468, 0.0
    %v1479 = vmax.f32 %v1469, 0.0
    %v1480 = vadd.f32 %v1476, %v1478
    %v1481 = vadd.f32 %v1477, %v1479
    %vm1482 = vcmask 162816
    %v1483 = vsel %vm1482, %v1480, 0.0
    %v1484 = vsel %vm1482, %v1481, 0.0
    %v1485 = vadd.f32 %v1483, %v1484
    %1486 = vadd.xlane.f32.xlu0 %v1485
    %v1487 = vpop.xlane.xlu0 %1486
    %v1488 = vrot.slane %v1487, 4
    %v1489 = vadd.f32 %v1487, %v1488
    %v1490 = vrot.slane %v1489, 2
    %v1491 = vadd.f32 %v1489, %v1490
    %v1492 = vrot.slane %v1491, 1
    %v1493 = vadd.f32 %v1491, %v1492
    %s1494 = vtos %v1493
    %s1495 = smul.f32 %s1494, 0.1
    %v1496 = vstv %s1495
    %vm1497 = vcmask 0
    %1498 = vst.msk [vmem:[#allocation8] sm:$0x1] %vm1497, %v1496
    // Predicated region
    $region18: #{tpu_custom_call.1} parent=1 // pred_check
      _
    $region19: #{tpu_custom_call.1} parent=1 // pred_check_branch
      %1500 = sbr.rel (0) target = $region21
    $region20: #{tpu_custom_call.1} parent=1 // pred_region
      %s1502 = ssub.s32 16, 16
      %1503 = vsyncadd [#allocation5], %s1502
      %s1505 = sshll.u32 [#allocation8], 4
      %s1506 = int_to_ptr.vmem [resolvable:$true] %s1505
      %1508 = dma.vmem_to_hbm [thread:$0]  %s1506, 16, %s2, [#allocation5]
    $region21: #{tpu_custom_call.1} parent=1 // pred_fallthru
      _
    // Predicated region
    $region22: #{tpu_custom_call.1} parent=1 // pred_check
      _
    $region23: #{tpu_custom_call.1} parent=1 // pred_check_branch
      %1510 = sbr.rel (0) target = $region25
    $region24: #{tpu_custom_call.1} parent=1 // pred_region
      %1511 = dma.done [#allocation5], 16
    $region25: #{tpu_custom_call.1} parent=1 // pred_fallthru
      _
    %1512 = vsyncpa [#allocation4], 1
    %1513 = vsyncpa [#allocation5], 1
    %1514 = vsyncpa [#allocation6], 1

</llo_original>
